<compile_context>
chip_gen: v6e
topology: v6e:2x2x1
jax: 0.10.0
libtpu: 0.0.40
codegen_flags: <defaults>
</compile_context>

<pallas_src>
import jax
import jax.numpy as jnp
import numpy as np
from jax.experimental import pallas as pl
from jax.experimental.pallas import tpu as pltpu


# -----------------------------------------------------------------------------
# Pallas kernel: entire QNetwork forward.
# -----------------------------------------------------------------------------
def qnetwork_kernel(
    x_ref,                         # (T*B, S)    state, time-major flattened
    wih0_ref,                      # (S, H)      RNN layer 0 input weights (pre-transposed)
    whh0_ref,                      # (H, H)      RNN layer 0 recurrent weights (pre-transposed)
    b0_ref,                        # (1, H)      b_ih0 + b_hh0
    wl1_ref,                       # (2H, H)     [wih1^T ; whh1^T] fused layer-1 weight
    b1_ref,                        # (1, H)      b_ih1 + b_hh1
    w1_hbm_ref,                    # (T*H, 256)  self.hidden weights (pre-transposed), in HBM
    bl1_ref,                       # (1, 256)
    w2_ref,                        # (256, 64)   self.hidden2 (pre-transposed)
    b2_ref,                        # (1, 64)
    w3_ref,                        # (64, A)     self.output (pre-transposed)
    b3_ref,                        # (1, A)
    out_ref,                       # (B, A)
    w1_vmem,                       # VMEM scratch (T*H, 256)
    w1_sem,                        # DMA semaphore
):
    TB, _ = x_ref.shape
    H = whh0_ref.shape[0]
    T = w1_vmem.shape[0] // H
    B = TB // T
    f32 = jnp.float32

    # Kick off the W1^T HBM -> VMEM DMA; it is hidden behind the recurrence.
    w1_copy = pltpu.make_async_copy(w1_hbm_ref, w1_vmem, w1_sem)
    w1_copy.start()

    wih0 = wih0_ref[...]
    whh0 = whh0_ref[...]
    wl1 = wl1_ref[...]
    b1 = jnp.broadcast_to(b1_ref[...], (B, H))     # hoisted broadcast (no per-iter re-emit)

    # All T layer-0 input projections in ONE matmul (independent of the
    # recurrence -> fully off the serial chain).  Row t*B + b == state[b, t, :].
    u0_all = jnp.dot(x_ref[...], wih0, preferred_element_type=f32) + b0_ref[...]

    # Wavefront over the two tanh RNN layers (T is small & static -> unrolled).
    # h_{-1} = 0 for both layers, so the recurrent matmuls at t = 0 are skipped.
    h0 = jnp.tanh(u0_all[0:B, :])
    h1 = jnp.tanh(jnp.dot(h0, wl1[:H, :], preferred_element_type=f32) + b1)
    h1_steps = [h1]
    for t in range(1, T):
        # layer-0 step t (depends only on h0_{t-1})
        h0 = jnp.tanh(u0_all[t * B:(t + 1) * B, :]
                      + jnp.dot(h0, whh0, preferred_element_type=f32))
        # layer-1 step t: single fused matmul on the lane-concat of (h0_t, h1_{t-1}).
        h1 = jnp.tanh(jnp.dot(jnp.concatenate([h0, h1], axis=-1), wl1,
                              preferred_element_type=f32) + b1)
        h1_steps.append(h1)

    # self.hidden: relu(flat) @ W1^T + b as ONE K=T*H matmul — the lane-concat of
    # 128-lane-aligned pieces is vreg placement; the reduction stays in the MXU.
    flat = jnp.maximum(jnp.concatenate(h1_steps, axis=-1), 0.0)    # (B, T*H)
    w1_copy.wait()
    a = jnp.dot(flat, w1_vmem[...], preferred_element_type=f32) + bl1_ref[...]

    # self.hidden2 and self.output.
    a = jnp.maximum(a, 0.0)
    a = jnp.dot(a, w2_ref[...], preferred_element_type=f32) + b2_ref[...]
    a = jnp.maximum(a, 0.0)
    a = jnp.dot(a, w3_ref[...], preferred_element_type=f32) + b3_ref[...]
    out_ref[...] = a.astype(out_ref.dtype)


# -----------------------------------------------------------------------------
# Parameter re-layout (done once, outside the kernel)
# -----------------------------------------------------------------------------
def prepare_params(p):
    """Convert PyTorch-layout params to kernel layout:
    weights transposed to (in_features, out_features), RNN biases pre-summed,
    layer-1 input/recurrent weights fused row-wise into a single (2H, H) matrix."""
    return {
        "wih0_t": p["wih0"].T,
        "whh0_t": p["whh0"].T,
        "b0": p["bih0"] + p["bhh0"],
        "wl1": jnp.concatenate([p["wih1"].T, p["whh1"].T], axis=0),   # (2H, H)
        "b1": p["bih1"] + p["bhh1"],
        "w1_t": p["w1"].T, "b1l": p["b1"],
        "w2_t": p["w2"].T, "b2": p["b2"],
        "w3_t": p["w3"].T, "b3": p["b3"],
    }


# -----------------------------------------------------------------------------
# Wrapper
# -----------------------------------------------------------------------------
def qnetwork_forward(state, pp):
    B, T, S = state.shape
    H = pp["whh0_t"].shape[0]
    D1 = pp["w1_t"].shape[1]
    A = pp["w3_t"].shape[1]

    # Host-side relayout (free): (B, T, S) -> time-major (T*B, S) so the T input
    # projections become one matmul and u0[t] are clean 2-row sublane slices.
    x_tb = jnp.transpose(state, (1, 0, 2)).reshape(T * B, S)

    vmem = pl.BlockSpec(memory_space=pltpu.MemorySpace.VMEM)
    hbm = pl.BlockSpec(memory_space=pl.ANY)    # W1^T stays in HBM; DMA'd manually

    args = (
        x_tb,
        pp["wih0_t"], pp["whh0_t"], pp["b0"],
        pp["wl1"], pp["b1"],
        pp["w1_t"], pp["b1l"],
        pp["w2_t"], pp["b2"],
        pp["w3_t"], pp["b3"],
    )
    in_specs = [vmem] * 6 + [hbm] + [vmem] * 5

    # TODO(synk): for batched replay evaluation on v7x, add a leading "parallel"
    # batch grid axis to engage the second TensorCore; irrelevant at B=2.
    return pl.pallas_call(
        qnetwork_kernel,
        out_shape=jax.ShapeDtypeStruct((B, A), jnp.float32),
        in_specs=in_specs,
        out_specs=vmem,
        scratch_shapes=[
            pltpu.VMEM((T * H, D1), jnp.float32),
            pltpu.SemaphoreType.DMA(()),
        ],
    )(*args)


# -----------------------------------------------------------------------------
# Deterministic parameter init (shapes from QNetwork.__init__, PyTorch layout)
# -----------------------------------------------------------------------------
def init_params(key, state_size, action_size, hidden_dim=128, step_window=5):
    ks = jax.random.split(key, 14)

    def u(k, shape, fan):
        bound = 1.0 / np.sqrt(fan)
        return jax.random.uniform(k, shape, jnp.float32, -bound, bound)

    H = hidden_dim
    return {
        # nn.RNN(state_size, 128, num_layers=2, batch_first=True)
        "wih0": u(ks[0], (H, state_size), H),
        "whh0": u(ks[1], (H, H), H),
        "bih0": u(ks[2], (1, H), H),
        "bhh0": u(ks[3], (1, H), H),
        "wih1": u(ks[4], (H, H), H),
        "whh1": u(ks[5], (H, H), H),
        "bih1": u(ks[6], (1, H), H),
        "bhh1": u(ks[7], (1, H), H),
        # nn.Linear(128 * 5, 256)
        "w1": u(ks[8], (256, H * step_window), H * step_window),
        "b1": u(ks[9], (1, 256), H * step_window),
        # nn.Linear(256, 64)
        "w2": u(ks[10], (64, 256), 256),
        "b2": u(ks[11], (1, 64), 256),
        # nn.Linear(64, action_size)
        "w3": u(ks[12], (action_size, 64), 64),
        "b3": u(ks[13], (1, action_size), 64),
    }


# -----------------------------------------------------------------------------
# Pure-JAX reference (uses original PyTorch-layout params)
# -----------------------------------------------------------------------------
def qnetwork_reference(state, p):
    B, T, _ = state.shape
    H = p["whh0"].shape[0]

    h = jnp.zeros((B, H), jnp.float32)
    o0 = []
    for t in range(T):
        h = jnp.tanh(state[:, t, :] @ p["wih0"].T + p["bih0"]
                     + h @ p["whh0"].T + p["bhh0"])
        o0.append(h)
    h = jnp.zeros((B, H), jnp.float32)
    o1 = []
    for t in range(T):
        h = jnp.tanh(o0[t] @ p["wih1"].T + p["bih1"]
                     + h @ p["whh1"].T + p["bhh1"])
        o1.append(h)
    x = jnp.concatenate(o1, axis=-1)
    x = jnp.maximum(x, 0.0)
    x = jnp.maximum(x @ p["w1"].T + p["b1"], 0.0)
    x = jnp.maximum(x @ p["w2"].T + p["b2"], 0.0)
    return x @ p["w3"].T + p["b3"]


if __name__ == "__main__":
    B, T, S, A = 2, 5, 8, 4          # batch, step_window, state_size, action_size

    key = jax.random.PRNGKey(0)
    k_param, k_state = jax.random.split(key)
    params = init_params(k_param, state_size=S, action_size=A, step_window=T)
    state = jax.random.normal(k_state, (B, T, S), jnp.float32)

    prepared = prepare_params(params)        # one-time weight re-layout

    out = qnetwork_forward(state, prepared)
    out = jax.block_until_ready(out)

    ref = qnetwork_reference(state, params)
    np.testing.assert_allclose(np.asarray(out), np.asarray(ref), rtol=1e-4, atol=1e-4)

    # TODO(synk): self.criterion (BCELoss) and self.optimizer (SGD) are training-only
    # attributes and are not part of the forward pass, so they are not implemented.
    print("KERNEL_OK")
</pallas_src>

<mosaic_0001>
module attributes {stable_mosaic.version = 11 : i64} {
  func.func @qnetwork_kernel(%arg0: memref<10x8xf32, #tpu.memory_space<vmem>>, %arg1: memref<8x128xf32, #tpu.memory_space<vmem>>, %arg2: memref<128x128xf32, #tpu.memory_space<vmem>>, %arg3: memref<1x128xf32, #tpu.memory_space<vmem>>, %arg4: memref<256x128xf32, #tpu.memory_space<vmem>>, %arg5: memref<1x128xf32, #tpu.memory_space<vmem>>, %arg6: memref<640x256xf32, #tpu.memory_space<any>>, %arg7: memref<1x256xf32, #tpu.memory_space<vmem>>, %arg8: memref<256x64xf32, #tpu.memory_space<vmem>>, %arg9: memref<1x64xf32, #tpu.memory_space<vmem>>, %arg10: memref<64x4xf32, #tpu.memory_space<vmem>>, %arg11: memref<1x4xf32, #tpu.memory_space<vmem>>, %arg12: memref<2x4xf32, #tpu.memory_space<vmem>>, %arg13: memref<640x256xf32, #tpu.memory_space<vmem>>, %arg14: memref<!tpu.dma_semaphore, #tpu.memory_space<semaphore_mem>>) attributes {dimension_semantics = [], scalar_prefetch = 0 : i64, scratch_operands = 2 : i64, tpu.core_type = #tpu.core_type<tc>} {
    tpu.enqueue_dma source(%arg6 : memref<640x256xf32, #tpu.memory_space<any>>) target(%arg13 : memref<640x256xf32, #tpu.memory_space<vmem>>) target_semaphore(%arg14 : memref<!tpu.dma_semaphore, #tpu.memory_space<semaphore_mem>>)
    %c0 = arith.constant 0 : index
    %c0_0 = arith.constant 0 : index
    %0 = vector.load %arg1[%c0, %c0_0] : memref<8x128xf32, #tpu.memory_space<vmem>>, vector<8x128xf32>
    %c0_1 = arith.constant 0 : index
    %c0_2 = arith.constant 0 : index
    %1 = vector.load %arg2[%c0_1, %c0_2] : memref<128x128xf32, #tpu.memory_space<vmem>>, vector<128x128xf32>
    %c0_3 = arith.constant 0 : index
    %c0_4 = arith.constant 0 : index
    %2 = vector.load %arg4[%c0_3, %c0_4] : memref<256x128xf32, #tpu.memory_space<vmem>>, vector<256x128xf32>
    %c0_5 = arith.constant 0 : index
    %c0_6 = arith.constant 0 : index
    %3 = vector.load %arg5[%c0_5, %c0_6] : memref<1x128xf32, #tpu.memory_space<vmem>>, vector<1x128xf32>
    %4 = vector.shape_cast %3 : vector<1x128xf32> to vector<1x128xf32>
    %5 = vector.broadcast %4 : vector<1x128xf32> to vector<2x128xf32>
    %c0_7 = arith.constant 0 : index
    %c0_8 = arith.constant 0 : index
    %6 = vector.load %arg0[%c0_7, %c0_8] : memref<10x8xf32, #tpu.memory_space<vmem>>, vector<10x8xf32>
    %cst = arith.constant dense<0.000000e+00> : vector<10x128xf32>
    %7 = tpu.matmul %6, %0, %cst {dimension_numbers = #tpu.dot_dimension_numbers<[1], [0], [0], [1], [0, 0, 1, 1], [], []>} : vector<10x8xf32>, vector<8x128xf32>, vector<10x128xf32> -> vector<10x128xf32>
    %c0_9 = arith.constant 0 : index
    %c0_10 = arith.constant 0 : index
    %8 = vector.load %arg3[%c0_9, %c0_10] : memref<1x128xf32, #tpu.memory_space<vmem>>, vector<1x128xf32>
    %9 = vector.broadcast %8 : vector<1x128xf32> to vector<10x128xf32>
    %10 = arith.addf %7, %9 : vector<10x128xf32>
    %11 = vector.extract_strided_slice %10 {offsets = [0, 0], sizes = [2, 128], strides = [1, 1]} : vector<10x128xf32> to vector<2x128xf32>
    %12 = math.tanh %11 : vector<2x128xf32>
    %13 = vector.extract_strided_slice %2 {offsets = [0, 0], sizes = [128, 128], strides = [1, 1]} : vector<256x128xf32> to vector<128x128xf32>
    %cst_11 = arith.constant dense<0.000000e+00> : vector<2x128xf32>
    %14 = tpu.matmul %12, %13, %cst_11 {dimension_numbers = #tpu.dot_dimension_numbers<[1], [0], [0], [1], [0, 0, 1, 1], [], []>} : vector<2x128xf32>, vector<128x128xf32>, vector<2x128xf32> -> vector<2x128xf32>
    %15 = arith.addf %14, %5 : vector<2x128xf32>
    %16 = math.tanh %15 : vector<2x128xf32>
    %17 = vector.extract_strided_slice %10 {offsets = [2, 0], sizes = [2, 128], strides = [1, 1]} : vector<10x128xf32> to vector<2x128xf32>
    %cst_12 = arith.constant dense<0.000000e+00> : vector<2x128xf32>
    %18 = tpu.matmul %12, %1, %cst_12 {dimension_numbers = #tpu.dot_dimension_numbers<[1], [0], [0], [1], [0, 0, 1, 1], [], []>} : vector<2x128xf32>, vector<128x128xf32>, vector<2x128xf32> -> vector<2x128xf32>
    %19 = arith.addf %17, %18 : vector<2x128xf32>
    %20 = math.tanh %19 : vector<2x128xf32>
    %21 = tpu.concatenate %20, %16 in 1 : vector<2x128xf32>, vector<2x128xf32> -> vector<2x256xf32>
    %cst_13 = arith.constant dense<0.000000e+00> : vector<2x128xf32>
    %22 = tpu.matmul %21, %2, %cst_13 {dimension_numbers = #tpu.dot_dimension_numbers<[1], [0], [0], [1], [0, 0, 1, 1], [], []>} : vector<2x256xf32>, vector<256x128xf32>, vector<2x128xf32> -> vector<2x128xf32>
    %23 = arith.addf %22, %5 : vector<2x128xf32>
    %24 = math.tanh %23 : vector<2x128xf32>
    %25 = vector.extract_strided_slice %10 {offsets = [4, 0], sizes = [2, 128], strides = [1, 1]} : vector<10x128xf32> to vector<2x128xf32>
    %cst_14 = arith.constant dense<0.000000e+00> : vector<2x128xf32>
    %26 = tpu.matmul %20, %1, %cst_14 {dimension_numbers = #tpu.dot_dimension_numbers<[1], [0], [0], [1], [0, 0, 1, 1], [], []>} : vector<2x128xf32>, vector<128x128xf32>, vector<2x128xf32> -> vector<2x128xf32>
    %27 = arith.addf %25, %26 : vector<2x128xf32>
    %28 = math.tanh %27 : vector<2x128xf32>
    %29 = tpu.concatenate %28, %24 in 1 : vector<2x128xf32>, vector<2x128xf32> -> vector<2x256xf32>
    %cst_15 = arith.constant dense<0.000000e+00> : vector<2x128xf32>
    %30 = tpu.matmul %29, %2, %cst_15 {dimension_numbers = #tpu.dot_dimension_numbers<[1], [0], [0], [1], [0, 0, 1, 1], [], []>} : vector<2x256xf32>, vector<256x128xf32>, vector<2x128xf32> -> vector<2x128xf32>
    %31 = arith.addf %30, %5 : vector<2x128xf32>
    %32 = math.tanh %31 : vector<2x128xf32>
    %33 = vector.extract_strided_slice %10 {offsets = [6, 0], sizes = [2, 128], strides = [1, 1]} : vector<10x128xf32> to vector<2x128xf32>
    %cst_16 = arith.constant dense<0.000000e+00> : vector<2x128xf32>
    %34 = tpu.matmul %28, %1, %cst_16 {dimension_numbers = #tpu.dot_dimension_numbers<[1], [0], [0], [1], [0, 0, 1, 1], [], []>} : vector<2x128xf32>, vector<128x128xf32>, vector<2x128xf32> -> vector<2x128xf32>
    %35 = arith.addf %33, %34 : vector<2x128xf32>
    %36 = math.tanh %35 : vector<2x128xf32>
    %37 = tpu.concatenate %36, %32 in 1 : vector<2x128xf32>, vector<2x128xf32> -> vector<2x256xf32>
    %cst_17 = arith.constant dense<0.000000e+00> : vector<2x128xf32>
    %38 = tpu.matmul %37, %2, %cst_17 {dimension_numbers = #tpu.dot_dimension_numbers<[1], [0], [0], [1], [0, 0, 1, 1], [], []>} : vector<2x256xf32>, vector<256x128xf32>, vector<2x128xf32> -> vector<2x128xf32>
    %39 = arith.addf %38, %5 : vector<2x128xf32>
    %40 = math.tanh %39 : vector<2x128xf32>
    %41 = vector.extract_strided_slice %10 {offsets = [8, 0], sizes = [2, 128], strides = [1, 1]} : vector<10x128xf32> to vector<2x128xf32>
    %cst_18 = arith.constant dense<0.000000e+00> : vector<2x128xf32>
    %42 = tpu.matmul %36, %1, %cst_18 {dimension_numbers = #tpu.dot_dimension_numbers<[1], [0], [0], [1], [0, 0, 1, 1], [], []>} : vector<2x128xf32>, vector<128x128xf32>, vector<2x128xf32> -> vector<2x128xf32>
    %43 = arith.addf %41, %42 : vector<2x128xf32>
    %44 = math.tanh %43 : vector<2x128xf32>
    %45 = tpu.concatenate %44, %40 in 1 : vector<2x128xf32>, vector<2x128xf32> -> vector<2x256xf32>
    %cst_19 = arith.constant dense<0.000000e+00> : vector<2x128xf32>
    %46 = tpu.matmul %45, %2, %cst_19 {dimension_numbers = #tpu.dot_dimension_numbers<[1], [0], [0], [1], [0, 0, 1, 1], [], []>} : vector<2x256xf32>, vector<256x128xf32>, vector<2x128xf32> -> vector<2x128xf32>
    %47 = arith.addf %46, %5 : vector<2x128xf32>
    %48 = math.tanh %47 : vector<2x128xf32>
    %49 = tpu.concatenate %16, %24, %32, %40, %48 in 1 : vector<2x128xf32>, vector<2x128xf32>, vector<2x128xf32>, vector<2x128xf32>, vector<2x128xf32> -> vector<2x640xf32>
    %cst_20 = arith.constant 0.000000e+00 : f32
    %50 = vector.broadcast %cst_20 : f32 to vector<2x640xf32>
    %51 = arith.maximumf %49, %50 : vector<2x640xf32>
    tpu.wait_dma2 semaphore(%arg14 : memref<!tpu.dma_semaphore, #tpu.memory_space<semaphore_mem>>) src(%arg6 : memref<640x256xf32, #tpu.memory_space<any>>) dst(%arg13 : memref<640x256xf32, #tpu.memory_space<vmem>>)
    %c0_21 = arith.constant 0 : index
    %c0_22 = arith.constant 0 : index
    %52 = vector.load %arg13[%c0_21, %c0_22] : memref<640x256xf32, #tpu.memory_space<vmem>>, vector<640x256xf32>
    %cst_23 = arith.constant dense<0.000000e+00> : vector<2x256xf32>
    %53 = tpu.matmul %51, %52, %cst_23 {dimension_numbers = #tpu.dot_dimension_numbers<[1], [0], [0], [1], [0, 0, 1, 1], [], []>} : vector<2x640xf32>, vector<640x256xf32>, vector<2x256xf32> -> vector<2x256xf32>
    %c0_24 = arith.constant 0 : index
    %c0_25 = arith.constant 0 : index
    %54 = vector.load %arg7[%c0_24, %c0_25] : memref<1x256xf32, #tpu.memory_space<vmem>>, vector<1x256xf32>
    %55 = vector.broadcast %54 : vector<1x256xf32> to vector<2x256xf32>
    %56 = arith.addf %53, %55 : vector<2x256xf32>
    %cst_26 = arith.constant 0.000000e+00 : f32
    %57 = vector.broadcast %cst_26 : f32 to vector<2x256xf32>
    %58 = arith.maximumf %56, %57 : vector<2x256xf32>
    %c0_27 = arith.constant 0 : index
    %c0_28 = arith.constant 0 : index
    %59 = vector.load %arg8[%c0_27, %c0_28] : memref<256x64xf32, #tpu.memory_space<vmem>>, vector<256x64xf32>
    %cst_29 = arith.constant dense<0.000000e+00> : vector<2x64xf32>
    %60 = tpu.matmul %58, %59, %cst_29 {dimension_numbers = #tpu.dot_dimension_numbers<[1], [0], [0], [1], [0, 0, 1, 1], [], []>} : vector<2x256xf32>, vector<256x64xf32>, vector<2x64xf32> -> vector<2x64xf32>
    %c0_30 = arith.constant 0 : index
    %c0_31 = arith.constant 0 : index
    %61 = vector.load %arg9[%c0_30, %c0_31] : memref<1x64xf32, #tpu.memory_space<vmem>>, vector<1x64xf32>
    %62 = vector.broadcast %61 : vector<1x64xf32> to vector<2x64xf32>
    %63 = arith.addf %60, %62 : vector<2x64xf32>
    %cst_32 = arith.constant 0.000000e+00 : f32
    %64 = vector.broadcast %cst_32 : f32 to vector<2x64xf32>
    %65 = arith.maximumf %63, %64 : vector<2x64xf32>
    %c0_33 = arith.constant 0 : index
    %c0_34 = arith.constant 0 : index
    %66 = vector.load %arg10[%c0_33, %c0_34] : memref<64x4xf32, #tpu.memory_space<vmem>>, vector<64x4xf32>
    %cst_35 = arith.constant dense<0.000000e+00> : vector<2x4xf32>
    %67 = tpu.matmul %65, %66, %cst_35 {dimension_numbers = #tpu.dot_dimension_numbers<[1], [0], [0], [1], [0, 0, 1, 1], [], []>} : vector<2x64xf32>, vector<64x4xf32>, vector<2x4xf32> -> vector<2x4xf32>
    %c0_36 = arith.constant 0 : index
    %c0_37 = arith.constant 0 : index
    %68 = vector.load %arg11[%c0_36, %c0_37] : memref<1x4xf32, #tpu.memory_space<vmem>>, vector<1x4xf32>
    %69 = vector.broadcast %68 : vector<1x4xf32> to vector<2x4xf32>
    %70 = arith.addf %67, %69 : vector<2x4xf32>
    %c0_38 = arith.constant 0 : index
    %c0_39 = arith.constant 0 : index
    %71 = vector.load %arg12[%c0_38, %c0_39] : memref<2x4xf32, #tpu.memory_space<vmem>>, vector<2x4xf32>
    tpu.vector_store %arg12[%c0_38, %c0_39], %70 {strides = array<i32>} : memref<2x4xf32, #tpu.memory_space<vmem>>, vector<2x4xf32>,
    return
  }
}

</mosaic_0001>

<llo_original>
// kernel: tpu_custom_call.1
$region0: #{tpu_custom_call.1}
  #allocation0 [shape = 'u32[]', space=smem, size = 0x4, offset = 0x4, fixed_abs, tag = 'smem constant byte address 0x4 - core index']
  #allocation1 [shape = 'u32[144,128]{1,0:T(1,128)}', space=vmem, size = 0x12000, scoped, tag = 'internal scratch']
  #allocation2 [shape = 'f32[640,256]{1,0:T(8,128)}', space=vmem, size = 0xa0000, scoped, tag = 'scratch operand']
  #allocation3 [shape = 's32[1]{0}', space=sflag, size = 0x4, scoped, tag = 'scratch operand']
  #allocation6 [shape = 's32[]', space=sflag, size = 0x4, offset = 0, fixed_abs, tag = 'sflag constant byte address 0x0 - dummy sync flag']
  #allocation7 [shape = 's32[]', space=sflag, size = 0x4, offset = 0, fixed_abs, tag = 'sflag constant byte address 0x0 - dummy sync flag']
  #allocation8 [shape = 'u32[]', space=smem, size = 0x4, offset = 0x44, fixed_abs, tag = 'smem constant byte address 0x44 - assertion arg 0']
  #allocation9 [shape = 'u32[]', space=smem, size = 0x4, offset = 0x48, fixed_abs, tag = 'smem constant byte address 0x48 - assertion arg 1']
  %s0 = inlined_call_operand.vmem [shape: f32[10,8], index: 0, kind: input, shape index: {}]
  %s1 = inlined_call_operand.vmem [shape: f32[8,128], index: 1, kind: input, shape index: {}]
  %s2 = inlined_call_operand.vmem [shape: f32[128,128], index: 2, kind: input, shape index: {}]
  %s3 = inlined_call_operand.vmem [shape: f32[1,128], index: 3, kind: input, shape index: {}]
  %s4 = inlined_call_operand.vmem [shape: f32[256,128], index: 4, kind: input, shape index: {}]
  %s5 = inlined_call_operand.vmem [shape: f32[1,128], index: 5, kind: input, shape index: {}]
  %s6 = inlined_call_operand.hbm [shape: f32[640,256], index: 6, kind: input, shape index: {}]
  %s7 = inlined_call_operand.vmem [shape: f32[1,256], index: 7, kind: input, shape index: {}]
  %s8 = inlined_call_operand.vmem [shape: f32[256,64], index: 8, kind: input, shape index: {}]
  %s9 = inlined_call_operand.vmem [shape: f32[1,64], index: 9, kind: input, shape index: {}]
  %s10 = inlined_call_operand.vmem [shape: f32[64,4], index: 10, kind: input, shape index: {}]
  %s11 = inlined_call_operand.vmem [shape: f32[1,4], index: 11, kind: input, shape index: {}]
  %s12 = inlined_call_operand.hbm [shape: f32[2,4], index: 12, kind: output, shape index: {}]
  %s13 = sld [smem:[#allocation0]]
  $region58: #{tpu_custom_call.1} parent=0
    _
  %s15 = ssub.s32 1, %s13
  %s16 = scalar_select 0, %s15, %s13
  $region1: #{tpu_custom_call.1} parent=0
    #allocation4 [shape = 'u8[1024]{0}', space=vmem, size = 0x400, scoped, tag = 'output window, operand 0, single buffered']
    #allocation5 [shape = 's32[1]{0}', space=sflag, size = 0x4, scoped, tag = 'scoped memory for tpu_custom_call.1']
    %17 = vsyncpa [#allocation5], 0
    // Predicated region
    $region2: #{tpu_custom_call.1} parent=1 // pred_check
      _
    $region3: #{tpu_custom_call.1} parent=1 // pred_check_branch
      %19 = sbr.rel (0) target = $region5
    $region4: #{tpu_custom_call.1} parent=1 // pred_region
      _
    $region5: #{tpu_custom_call.1} parent=1 // pred_fallthru
      _
    // Predicated region
    $region6: #{tpu_custom_call.1} parent=1 // pred_check
      _
    $region7: #{tpu_custom_call.1} parent=1 // pred_check_branch
      %21 = sbr.rel (0) target = $region9
    $region8: #{tpu_custom_call.1} parent=1 // pred_region
      _
    $region9: #{tpu_custom_call.1} parent=1 // pred_fallthru
      _
    // Predicated region
    $region10: #{tpu_custom_call.1} parent=1 // pred_check
      _
    $region11: #{tpu_custom_call.1} parent=1 // pred_check_branch
      %23 = sbr.rel (0) target = $region13
    $region12: #{tpu_custom_call.1} parent=1 // pred_region
      _
    $region13: #{tpu_custom_call.1} parent=1 // pred_fallthru
      _
    // Predicated region
    $region14: #{tpu_custom_call.1} parent=1 // pred_check
      _
    $region15: #{tpu_custom_call.1} parent=1 // pred_check_branch
      %25 = sbr.rel (0) target = $region17
    $region16: #{tpu_custom_call.1} parent=1 // pred_region
      _
    $region17: #{tpu_custom_call.1} parent=1 // pred_fallthru
      _
    // Predicated region
    $region18: #{tpu_custom_call.1} parent=1 // pred_check
      _
    $region19: #{tpu_custom_call.1} parent=1 // pred_check_branch
      %27 = sbr.rel (0) target = $region21
    $region20: #{tpu_custom_call.1} parent=1 // pred_region
      _
    $region21: #{tpu_custom_call.1} parent=1 // pred_fallthru
      _
    // Predicated region
    $region22: #{tpu_custom_call.1} parent=1 // pred_check
      _
    $region23: #{tpu_custom_call.1} parent=1 // pred_check_branch
      %29 = sbr.rel (0) target = $region25
    $region24: #{tpu_custom_call.1} parent=1 // pred_region
      _
    $region25: #{tpu_custom_call.1} parent=1 // pred_fallthru
      _
    // Predicated region
    $region26: #{tpu_custom_call.1} parent=1 // pred_check
      _
    $region27: #{tpu_custom_call.1} parent=1 // pred_check_branch
      %31 = sbr.rel (0) target = $region29
    $region28: #{tpu_custom_call.1} parent=1 // pred_region
      _
    $region29: #{tpu_custom_call.1} parent=1 // pred_fallthru
      _
    // Predicated region
    $region30: #{tpu_custom_call.1} parent=1 // pred_check
      _
    $region31: #{tpu_custom_call.1} parent=1 // pred_check_branch
      %33 = sbr.rel (0) target = $region33
    $region32: #{tpu_custom_call.1} parent=1 // pred_region
      _
    $region33: #{tpu_custom_call.1} parent=1 // pred_fallthru
      _
    // Predicated region
    $region34: #{tpu_custom_call.1} parent=1 // pred_check
      _
    $region35: #{tpu_custom_call.1} parent=1 // pred_check_branch
      %35 = sbr.rel (0) target = $region37
    $region36: #{tpu_custom_call.1} parent=1 // pred_region
      _
    $region37: #{tpu_custom_call.1} parent=1 // pred_fallthru
      _
    // Predicated region
    $region38: #{tpu_custom_call.1} parent=1 // pred_check
      _
    $region39: #{tpu_custom_call.1} parent=1 // pred_check_branch
      %37 = sbr.rel (0) target = $region41
    $region40: #{tpu_custom_call.1} parent=1 // pred_region
      _
    $region41: #{tpu_custom_call.1} parent=1 // pred_fallthru
      _
    // Predicated region
    $region42: #{tpu_custom_call.1} parent=1 // pred_check
      _
    $region43: #{tpu_custom_call.1} parent=1 // pred_check_branch
      %39 = sbr.rel (0) target = $region45
    $region44: #{tpu_custom_call.1} parent=1 // pred_region
      _
    $region45: #{tpu_custom_call.1} parent=1 // pred_fallthru
      _
    // Predicated region
    $region46: #{tpu_custom_call.1} parent=1 // pred_check
      _
    $region47: #{tpu_custom_call.1} parent=1 // pred_check_branch
      %41 = sbr.rel target = $region49
    $region48: #{tpu_custom_call.1} parent=1 // pred_region
      %42 = sst [smem:[#allocation8]] [#allocation7]
      %43 = sst [smem:[#allocation9]] [#allocation6]
    $region49: #{tpu_custom_call.1} parent=1 // pred_fallthru
      _
    %45 = shalt.err (0)
    %s47 = sshll.u32 [#allocation2], 4
    %s48 = int_to_ptr.vmem [resolvable:$true] %s47
    %50 = dma.hbm_to_vmem [thread:$0]  %s6, 20480, %s48, [#allocation3]
    %v51 = vld [vmem:[%s1] sm:$0xff]
    %v52 = vld [vmem:[%s2] sm:$0xff]
    %v53 = vld [vmem:[%s2 + $0x8] sm:$0xff]
    %v54 = vld [vmem:[%s2 + $0x10] sm:$0xff]
    %v55 = vld [vmem:[%s2 + $0x18] sm:$0xff]
    %v56 = vld [vmem:[%s2 + $0x20] sm:$0xff]
    %v57 = vld [vmem:[%s2 + $0x28] sm:$0xff]
    %v58 = vld [vmem:[%s2 + $0x30] sm:$0xff]
    %v59 = vld [vmem:[%s2 + $0x38] sm:$0xff]
    %v60 = vld [vmem:[%s2 + $0x40] sm:$0xff]
    %v61 = vld [vmem:[%s2 + $0x48] sm:$0xff]
    %v62 = vld [vmem:[%s2 + $0x50] sm:$0xff]
    %v63 = vld [vmem:[%s2 + $0x58] sm:$0xff]
    %v64 = vld [vmem:[%s2 + $0x60] sm:$0xff]
    %v65 = vld [vmem:[%s2 + $0x68] sm:$0xff]
    %v66 = vld [vmem:[%s2 + $0x70] sm:$0xff]
    %v67 = vld [vmem:[%s2 + $0x78] sm:$0xff]
    %v68 = vld [vmem:[%s4] sm:$0xff]
    %v69 = vld [vmem:[%s4 + $0x8] sm:$0xff]
    %v70 = vld [vmem:[%s4 + $0x10] sm:$0xff]
    %v71 = vld [vmem:[%s4 + $0x18] sm:$0xff]
    %v72 = vld [vmem:[%s4 + $0x20] sm:$0xff]
    %v73 = vld [vmem:[%s4 + $0x28] sm:$0xff]
    %v74 = vld [vmem:[%s4 + $0x30] sm:$0xff]
    %v75 = vld [vmem:[%s4 + $0x38] sm:$0xff]
    %v76 = vld [vmem:[%s4 + $0x40] sm:$0xff]
    %v77 = vld [vmem:[%s4 + $0x48] sm:$0xff]
    %v78 = vld [vmem:[%s4 + $0x50] sm:$0xff]
    %v79 = vld [vmem:[%s4 + $0x58] sm:$0xff]
    %v80 = vld [vmem:[%s4 + $0x60] sm:$0xff]
    %v81 = vld [vmem:[%s4 + $0x68] sm:$0xff]
    %v82 = vld [vmem:[%s4 + $0x70] sm:$0xff]
    %v83 = vld [vmem:[%s4 + $0x78] sm:$0xff]
    %v84 = vld [vmem:[%s4 + $0x80] sm:$0xff]
    %v85 = vld [vmem:[%s4 + $0x88] sm:$0xff]
    %v86 = vld [vmem:[%s4 + $0x90] sm:$0xff]
    %v87 = vld [vmem:[%s4 + $0x98] sm:$0xff]
    %v88 = vld [vmem:[%s4 + $0xa0] sm:$0xff]
    %v89 = vld [vmem:[%s4 + $0xa8] sm:$0xff]
    %v90 = vld [vmem:[%s4 + $0xb0] sm:$0xff]
    %v91 = vld [vmem:[%s4 + $0xb8] sm:$0xff]
    %v92 = vld [vmem:[%s4 + $0xc0] sm:$0xff]
    %v93 = vld [vmem:[%s4 + $0xc8] sm:$0xff]
    %v94 = vld [vmem:[%s4 + $0xd0] sm:$0xff]
    %v95 = vld [vmem:[%s4 + $0xd8] sm:$0xff]
    %v96 = vld [vmem:[%s4 + $0xe0] sm:$0xff]
    %v97 = vld [vmem:[%s4 + $0xe8] sm:$0xff]
    %v98 = vld [vmem:[%s4 + $0xf0] sm:$0xff]
    %v99 = vld [vmem:[%s4 + $0xf8] sm:$0xff]
    %v100 = vld [vmem:[%s5] sm:$0x1]
    %v102 = vlaneseq
    %v103 = vshrl.u32 %v102, 7
    %v104 = vsub.s32 0, %v103
    %v105 = vrot.slane %v100, %v104
    %v107 = vld [vmem:[%s0] sm:$0xff]
    %v108 = vld [vmem:[%s0 + $0x8] sm:$0x3]
    %v109 = vld [vmem:[%s3] sm:$0x1]
    %v111 = vlaneseq
    %v112 = vshrl.u32 %v111, 7
    %v113 = vsub.s32 0, %v112
    %v114 = vrot.slane %v109, %v113
    %vm116 = vcmask 64512
    %v118 = vsel %vm116, %v107, 0
    %v121 = vsel %vm116, %v108, 0
    %123 = vmatprep.subr.mxu0 0.0
    %124 = vmatpush1.msra.mxu0 0.0
    %125 = vmatprep.subr.mxu0 0.0
    %126 = vmatpush1.msra.mxu0 0.0
    %127 = vmatprep.subr.mxu0 0.0
    %128 = vmatpush1.msra.mxu0 0.0
    %129 = vmatprep.subr.mxu0 0.0
    %130 = vmatpush1.msra.mxu0 0.0
    %131 = vmatprep.subr.mxu0 0.0
    %132 = vmatpush1.msra.mxu0 0.0
    %133 = vmatprep.subr.mxu0 0.0
    %134 = vmatpush1.msra.mxu0 0.0
    %135 = vmatprep.subr.mxu0 0.0
    %136 = vmatpush1.msra.mxu0 0.0
    %137 = vmatprep.subr.mxu0 0.0
    %138 = vmatpush1.msra.mxu0 0.0
    %139 = vmatprep.subr.mxu0 0.0
    %140 = vmatpush1.msra.mxu0 0.0
    %141 = vmatprep.subr.mxu0 0.0
    %142 = vmatpush1.msra.mxu0 0.0
    %143 = vmatprep.subr.mxu0 0.0
    %144 = vmatpush1.msra.mxu0 0.0
    %145 = vmatprep.subr.mxu0 0.0
    %146 = vmatpush1.msra.mxu0 0.0
    %147 = vmatprep.subr.mxu0 0.0
    %148 = vmatpush1.msra.mxu0 0.0
    %149 = vmatprep.subr.mxu0 0.0
    %150 = vmatpush1.msra.mxu0 0.0
    %151 = vmatprep.subr.mxu0 0.0
    %152 = vmatpush1.msra.mxu0 0.0
    %153 = vmatprep.subr.mxu0 0.0
    %154 = vmatpush1.msra.mxu0 %v51
    %155 = vmatprep.subr.mxu0 0.0
    %156 = vmatpush2.msra.mxu0 0.0
    %157 = vmatprep.subr.mxu0 0.0
    %158 = vmatpush2.msra.mxu0 0.0
    %159 = vmatprep.subr.mxu0 0.0
    %160 = vmatpush2.msra.mxu0 0.0
    %161 = vmatprep.subr.mxu0 0.0
    %162 = vmatpush2.msra.mxu0 0.0
    %163 = vmatprep.subr.mxu0 0.0
    %164 = vmatpush2.msra.mxu0 0.0
    %165 = vmatprep.subr.mxu0 0.0
    %166 = vmatpush2.msra.mxu0 0.0
    %167 = vmatprep.subr.mxu0 0.0
    %168 = vmatpush2.msra.mxu0 0.0
    %169 = vmatprep.subr.mxu0 0.0
    %170 = vmatpush2.msra.mxu0 0.0
    %171 = vmatprep.subr.mxu0 0.0
    %172 = vmatpush2.msra.mxu0 0.0
    %173 = vmatprep.subr.mxu0 0.0
    %174 = vmatpush2.msra.mxu0 0.0
    %175 = vmatprep.subr.mxu0 0.0
    %176 = vmatpush2.msra.mxu0 0.0
    %177 = vmatprep.subr.mxu0 0.0
    %178 = vmatpush2.msra.mxu0 0.0
    %179 = vmatprep.subr.mxu0 0.0
    %180 = vmatpush2.msra.mxu0 0.0
    %181 = vmatprep.subr.mxu0 0.0
    %182 = vmatpush2.msra.mxu0 0.0
    %183 = vmatprep.subr.mxu0 0.0
    %184 = vmatpush2.msra.mxu0 0.0
    %185 = vmatprep.subr.mxu0 0.0
    %186 = vmatpush2.msra.mxu0 0.0
    %187 = vmatprep.mubr.f32.mxu0 0.0
    %188 = vmatmul.mubr.f32.gmra.mxu0 %v118
    %v189 = vpop.f32.mrf.mxu0
    %v190 = vadd.f32 %v114, %v189
    %v191 = vpop.f32.mrf.mxu0
    %192 = vmatprep.mubr.f32.mxu0 0.0
    %193 = vmatmul.mubr.f32.gmra.mxu0 %v121
    %v194 = vpop.f32.mrf.mxu0
    %v195 = vadd.f32 %v114, %v194
    %v196 = vpop.f32.mrf.mxu0
    %197 = vdwg.mxu0
    %v198 = vtanh.pop %v190
    %199 = vmatprep.subr.mxu0 0.0
    %200 = vmatpush1.msra.mxu0 %v83
    %201 = vmatprep.subr.mxu0 0.0
    %202 = vmatpush1.msra.mxu0 %v82
    %203 = vmatprep.subr.mxu0 0.0
    %204 = vmatpush1.msra.mxu0 %v81
    %205 = vmatprep.subr.mxu0 0.0
    %206 = vmatpush1.msra.mxu0 %v80
    %207 = vmatprep.subr.mxu0 0.0
    %208 = vmatpush1.msra.mxu0 %v79
    %209 = vmatprep.subr.mxu0 0.0
    %210 = vmatpush1.msra.mxu0 %v78
    %211 = vmatprep.subr.mxu0 0.0
    %212 = vmatpush1.msra.mxu0 %v77
    %213 = vmatprep.subr.mxu0 0.0
    %214 = vmatpush1.msra.mxu0 %v76
    %215 = vmatprep.subr.mxu0 0.0
    %216 = vmatpush1.msra.mxu0 %v75
    %217 = vmatprep.subr.mxu0 0.0
    %218 = vmatpush1.msra.mxu0 %v74
    %219 = vmatprep.subr.mxu0 0.0
    %220 = vmatpush1.msra.mxu0 %v73
    %221 = vmatprep.subr.mxu0 0.0
    %222 = vmatpush1.msra.mxu0 %v72
    %223 = vmatprep.subr.mxu0 0.0
    %224 = vmatpush1.msra.mxu0 %v71
    %225 = vmatprep.subr.mxu0 0.0
    %226 = vmatpush1.msra.mxu0 %v70
    %227 = vmatprep.subr.mxu0 0.0
    %228 = vmatpush1.msra.mxu0 %v69
    %229 = vmatprep.subr.mxu0 0.0
    %230 = vmatpush1.msra.mxu0 %v68
    %231 = vmatprep.subr.mxu0 0.0
    %232 = vmatpush2.msra.mxu0 0.0
    %233 = vmatprep.subr.mxu0 0.0
    %234 = vmatpush2.msra.mxu0 0.0
    %235 = vmatprep.subr.mxu0 0.0
    %236 = vmatpush2.msra.mxu0 0.0
    %237 = vmatprep.subr.mxu0 0.0
    %238 = vmatpush2.msra.mxu0 0.0
    %239 = vmatprep.subr.mxu0 0.0
    %240 = vmatpush2.msra.mxu0 0.0
    %241 = vmatprep.subr.mxu0 0.0
    %242 = vmatpush2.msra.mxu0 0.0
    %243 = vmatprep.subr.mxu0 0.0
    %244 = vmatpush2.msra.mxu0 0.0
    %245 = vmatprep.subr.mxu0 0.0
    %246 = vmatpush2.msra.mxu0 0.0
    %247 = vmatprep.subr.mxu0 0.0
    %248 = vmatpush2.msra.mxu0 0.0
    %249 = vmatprep.subr.mxu0 0.0
    %250 = vmatpush2.msra.mxu0 0.0
    %251 = vmatprep.subr.mxu0 0.0
    %252 = vmatpush2.msra.mxu0 0.0
    %253 = vmatprep.subr.mxu0 0.0
    %254 = vmatpush2.msra.mxu0 0.0
    %255 = vmatprep.subr.mxu0 0.0
    %256 = vmatpush2.msra.mxu0 0.0
    %257 = vmatprep.subr.mxu0 0.0
    %258 = vmatpush2.msra.mxu0 0.0
    %259 = vmatprep.subr.mxu0 0.0
    %260 = vmatpush2.msra.mxu0 0.0
    %261 = vmatprep.subr.mxu0 0.0
    %262 = vmatpush2.msra.mxu0 0.0
    %263 = vmatprep.mubr.f32.mxu0 0.0
    %264 = vmatmul.mubr.f32.gmra.mxu0 %v198
    %v265 = vpop.f32.mrf.mxu0
    %v266 = vadd.f32 %v105, %v265
    %v267 = vpop.f32.mrf.mxu0
    %268 = vdwg.mxu0
    %v269 = vtanh.pop %v266
    %270 = vmatprep.subr.mxu0 0.0
    %271 = vmatpush1.msra.mxu0 %v67
    %272 = vmatprep.subr.mxu0 0.0
    %273 = vmatpush1.msra.mxu0 %v66
    %274 = vmatprep.subr.mxu0 0.0
    %275 = vmatpush1.msra.mxu0 %v65
    %276 = vmatprep.subr.mxu0 0.0
    %277 = vmatpush1.msra.mxu0 %v64
    %278 = vmatprep.subr.mxu0 0.0
    %279 = vmatpush1.msra.mxu0 %v63
    %280 = vmatprep.subr.mxu0 0.0
    %281 = vmatpush1.msra.mxu0 %v62
    %282 = vmatprep.subr.mxu0 0.0
    %283 = vmatpush1.msra.mxu0 %v61
    %284 = vmatprep.subr.mxu0 0.0
    %285 = vmatpush1.msra.mxu0 %v60
    %286 = vmatprep.subr.mxu0 0.0
    %287 = vmatpush1.msra.mxu0 %v59
    %288 = vmatprep.subr.mxu0 0.0
    %289 = vmatpush1.msra.mxu0 %v58
    %290 = vmatprep.subr.mxu0 0.0
    %291 = vmatpush1.msra.mxu0 %v57
    %292 = vmatprep.subr.mxu0 0.0
    %293 = vmatpush1.msra.mxu0 %v56
    %294 = vmatprep.subr.mxu0 0.0
    %295 = vmatpush1.msra.mxu0 %v55
    %296 = vmatprep.subr.mxu0 0.0
    %297 = vmatpush1.msra.mxu0 %v54
    %298 = vmatprep.subr.mxu0 0.0
    %299 = vmatpush1.msra.mxu0 %v53
    %300 = vmatprep.subr.mxu0 0.0
    %301 = vmatpush1.msra.mxu0 %v52
    %302 = vmatprep.subr.mxu0 0.0
    %303 = vmatpush2.msra.mxu0 0.0
    %304 = vmatprep.subr.mxu0 0.0
    %305 = vmatpush2.msra.mxu0 0.0
    %306 = vmatprep.subr.mxu0 0.0
    %307 = vmatpush2.msra.mxu0 0.0
    %308 = vmatprep.subr.mxu0 0.0
    %309 = vmatpush2.msra.mxu0 0.0
    %310 = vmatprep.subr.mxu0 0.0
    %311 = vmatpush2.msra.mxu0 0.0
    %312 = vmatprep.subr.mxu0 0.0
    %313 = vmatpush2.msra.mxu0 0.0
    %314 = vmatprep.subr.mxu0 0.0
    %315 = vmatpush2.msra.mxu0 0.0
    %316 = vmatprep.subr.mxu0 0.0
    %317 = vmatpush2.msra.mxu0 0.0
    %318 = vmatprep.subr.mxu0 0.0
    %319 = vmatpush2.msra.mxu0 0.0
    %320 = vmatprep.subr.mxu0 0.0
    %321 = vmatpush2.msra.mxu0 0.0
    %322 = vmatprep.subr.mxu0 0.0
    %323 = vmatpush2.msra.mxu0 0.0
    %324 = vmatprep.subr.mxu0 0.0
    %325 = vmatpush2.msra.mxu0 0.0
    %326 = vmatprep.subr.mxu0 0.0
    %327 = vmatpush2.msra.mxu0 0.0
    %328 = vmatprep.subr.mxu0 0.0
    %329 = vmatpush2.msra.mxu0 0.0
    %330 = vmatprep.subr.mxu0 0.0
    %331 = vmatpush2.msra.mxu0 0.0
    %332 = vmatprep.subr.mxu0 0.0
    %333 = vmatpush2.msra.mxu0 0.0
    %334 = vmatprep.mubr.f32.mxu0 0.0
    %335 = vmatmul.mubr.f32.gmra.mxu0 %v198
    %v336 = vpop.f32.mrf.mxu0
    %v337 = vadd.f32 0.0, %v336
    %v338 = vpop.f32.mrf.mxu0
    %339 = vdwg.mxu0
    %v341 = vrot.slane %v337, 6
    %v343 = vadd.f32 %v190, %v341
    %v344 = vtanh.pop %v343
    %v346 = vrot.slane %v269, 6
    %v348 = vrot.slane %v344, 2
    %v349 = vrot.slane %v346, 2
    %352 = vmatprep.subr.mxu0 0.0
    %353 = vmatpush1.msra.mxu0 %v83
    %354 = vmatprep.subr.mxu0 0.0
    %355 = vmatpush1.msra.mxu0 %v82
    %356 = vmatprep.subr.mxu0 0.0
    %357 = vmatpush1.msra.mxu0 %v81
    %358 = vmatprep.subr.mxu0 0.0
    %359 = vmatpush1.msra.mxu0 %v80
    %360 = vmatprep.subr.mxu0 0.0
    %361 = vmatpush1.msra.mxu0 %v79
    %362 = vmatprep.subr.mxu0 0.0
    %363 = vmatpush1.msra.mxu0 %v78
    %364 = vmatprep.subr.mxu0 0.0
    %365 = vmatpush1.msra.mxu0 %v77
    %366 = vmatprep.subr.mxu0 0.0
    %367 = vmatpush1.msra.mxu0 %v76
    %368 = vmatprep.subr.mxu0 0.0
    %369 = vmatpush1.msra.mxu0 %v75
    %370 = vmatprep.subr.mxu0 0.0
    %371 = vmatpush1.msra.mxu0 %v74
    %372 = vmatprep.subr.mxu0 0.0
    %373 = vmatpush1.msra.mxu0 %v73
    %374 = vmatprep.subr.mxu0 0.0
    %375 = vmatpush1.msra.mxu0 %v72
    %376 = vmatprep.subr.mxu0 0.0
    %377 = vmatpush1.msra.mxu0 %v71
    %378 = vmatprep.subr.mxu0 0.0
    %379 = vmatpush1.msra.mxu0 %v70
    %380 = vmatprep.subr.mxu0 0.0
    %381 = vmatpush1.msra.mxu0 %v69
    %382 = vmatprep.subr.mxu0 0.0
    %383 = vmatpush1.msra.mxu0 %v68
    %384 = vmatprep.subr.mxu0 0.0
    %385 = vmatpush2.msra.mxu0 %v99
    %386 = vmatprep.subr.mxu0 0.0
    %387 = vmatpush2.msra.mxu0 %v98
    %388 = vmatprep.subr.mxu0 0.0
    %389 = vmatpush2.msra.mxu0 %v97
    %390 = vmatprep.subr.mxu0 0.0
    %391 = vmatpush2.msra.mxu0 %v96
    %392 = vmatprep.subr.mxu0 0.0
    %393 = vmatpush2.msra.mxu0 %v95
    %394 = vmatprep.subr.mxu0 0.0
    %395 = vmatpush2.msra.mxu0 %v94
    %396 = vmatprep.subr.mxu0 0.0
    %397 = vmatpush2.msra.mxu0 %v93
    %398 = vmatprep.subr.mxu0 0.0
    %399 = vmatpush2.msra.mxu0 %v92
    %400 = vmatprep.subr.mxu0 0.0
    %401 = vmatpush2.msra.mxu0 %v91
    %402 = vmatprep.subr.mxu0 0.0
    %403 = vmatpush2.msra.mxu0 %v90
    %404 = vmatprep.subr.mxu0 0.0
    %405 = vmatpush2.msra.mxu0 %v89
    %406 = vmatprep.subr.mxu0 0.0
    %407 = vmatpush2.msra.mxu0 %v88
    %408 = vmatprep.subr.mxu0 0.0
    %409 = vmatpush2.msra.mxu0 %v87
    %410 = vmatprep.subr.mxu0 0.0
    %411 = vmatpush2.msra.mxu0 %v86
    %412 = vmatprep.subr.mxu0 0.0
    %413 = vmatpush2.msra.mxu0 %v85
    %414 = vmatprep.subr.mxu0 0.0
    %415 = vmatpush2.msra.mxu0 %v84
    %416 = vmatprep.mubr.f32.mxu0 %v349
    %417 = vmatmul.mubr.f32.gmra.mxu0 %v348
    %v418 = vpop.f32.mrf.mxu0
    %v419 = vadd.f32 %v105, %v418
    %v420 = vpop.f32.mrf.mxu0
    %421 = vdwg.mxu0
    %v422 = vtanh.pop %v419
    %423 = vmatprep.subr.mxu0 0.0
    %424 = vmatpush1.msra.mxu0 %v67
    %425 = vmatprep.subr.mxu0 0.0
    %426 = vmatpush1.msra.mxu0 %v66
    %427 = vmatprep.subr.mxu0 0.0
    %428 = vmatpush1.msra.mxu0 %v65
    %429 = vmatprep.subr.mxu0 0.0
    %430 = vmatpush1.msra.mxu0 %v64
    %431 = vmatprep.subr.mxu0 0.0
    %432 = vmatpush1.msra.mxu0 %v63
    %433 = vmatprep.subr.mxu0 0.0
    %434 = vmatpush1.msra.mxu0 %v62
    %435 = vmatprep.subr.mxu0 0.0
    %436 = vmatpush1.msra.mxu0 %v61
    %437 = vmatprep.subr.mxu0 0.0
    %438 = vmatpush1.msra.mxu0 %v60
    %439 = vmatprep.subr.mxu0 0.0
    %440 = vmatpush1.msra.mxu0 %v59
    %441 = vmatprep.subr.mxu0 0.0
    %442 = vmatpush1.msra.mxu0 %v58
    %443 = vmatprep.subr.mxu0 0.0
    %444 = vmatpush1.msra.mxu0 %v57
    %445 = vmatprep.subr.mxu0 0.0
    %446 = vmatpush1.msra.mxu0 %v56
    %447 = vmatprep.subr.mxu0 0.0
    %448 = vmatpush1.msra.mxu0 %v55
    %449 = vmatprep.subr.mxu0 0.0
    %450 = vmatpush1.msra.mxu0 %v54
    %451 = vmatprep.subr.mxu0 0.0
    %452 = vmatpush1.msra.mxu0 %v53
    %453 = vmatprep.subr.mxu0 0.0
    %454 = vmatpush1.msra.mxu0 %v52
    %455 = vmatprep.subr.mxu0 0.0
    %456 = vmatpush2.msra.mxu0 0.0
    %457 = vmatprep.subr.mxu0 0.0
    %458 = vmatpush2.msra.mxu0 0.0
    %459 = vmatprep.subr.mxu0 0.0
    %460 = vmatpush2.msra.mxu0 0.0
    %461 = vmatprep.subr.mxu0 0.0
    %462 = vmatpush2.msra.mxu0 0.0
    %463 = vmatprep.subr.mxu0 0.0
    %464 = vmatpush2.msra.mxu0 0.0
    %465 = vmatprep.subr.mxu0 0.0
    %466 = vmatpush2.msra.mxu0 0.0
    %467 = vmatprep.subr.mxu0 0.0
    %468 = vmatpush2.msra.mxu0 0.0
    %469 = vmatprep.subr.mxu0 0.0
    %470 = vmatpush2.msra.mxu0 0.0
    %471 = vmatprep.subr.mxu0 0.0
    %472 = vmatpush2.msra.mxu0 0.0
    %473 = vmatprep.subr.mxu0 0.0
    %474 = vmatpush2.msra.mxu0 0.0
    %475 = vmatprep.subr.mxu0 0.0
    %476 = vmatpush2.msra.mxu0 0.0
    %477 = vmatprep.subr.mxu0 0.0
    %478 = vmatpush2.msra.mxu0 0.0
    %479 = vmatprep.subr.mxu0 0.0
    %480 = vmatpush2.msra.mxu0 0.0
    %481 = vmatprep.subr.mxu0 0.0
    %482 = vmatpush2.msra.mxu0 0.0
    %483 = vmatprep.subr.mxu0 0.0
    %484 = vmatpush2.msra.mxu0 0.0
    %485 = vmatprep.subr.mxu0 0.0
    %486 = vmatpush2.msra.mxu0 0.0
    %487 = vmatprep.mubr.f32.mxu0 0.0
    %488 = vmatmul.mubr.f32.gmra.mxu0 %v348
    %v489 = vpop.f32.mrf.mxu0
    %v490 = vadd.f32 0.0, %v489
    %v491 = vpop.f32.mrf.mxu0
    %492 = vdwg.mxu0
    %v494 = vrot.slane %v490, 4
    %v496 = vadd.f32 %v190, %v494
    %v497 = vtanh.pop %v496
    %v499 = vrot.slane %v422, 4
    %v501 = vrot.slane %v497, 4
    %v502 = vrot.slane %v499, 4
    %505 = vmatprep.subr.mxu0 0.0
    %506 = vmatpush1.msra.mxu0 %v83
    %507 = vmatprep.subr.mxu0 0.0
    %508 = vmatpush1.msra.mxu0 %v82
    %509 = vmatprep.subr.mxu0 0.0
    %510 = vmatpush1.msra.mxu0 %v81
    %511 = vmatprep.subr.mxu0 0.0
    %512 = vmatpush1.msra.mxu0 %v80
    %513 = vmatprep.subr.mxu0 0.0
    %514 = vmatpush1.msra.mxu0 %v79
    %515 = vmatprep.subr.mxu0 0.0
    %516 = vmatpush1.msra.mxu0 %v78
    %517 = vmatprep.subr.mxu0 0.0
    %518 = vmatpush1.msra.mxu0 %v77
    %519 = vmatprep.subr.mxu0 0.0
    %520 = vmatpush1.msra.mxu0 %v76
    %521 = vmatprep.subr.mxu0 0.0
    %522 = vmatpush1.msra.mxu0 %v75
    %523 = vmatprep.subr.mxu0 0.0
    %524 = vmatpush1.msra.mxu0 %v74
    %525 = vmatprep.subr.mxu0 0.0
    %526 = vmatpush1.msra.mxu0 %v73
    %527 = vmatprep.subr.mxu0 0.0
    %528 = vmatpush1.msra.mxu0 %v72
    %529 = vmatprep.subr.mxu0 0.0
    %530 = vmatpush1.msra.mxu0 %v71
    %531 = vmatprep.subr.mxu0 0.0
    %532 = vmatpush1.msra.mxu0 %v70
    %533 = vmatprep.subr.mxu0 0.0
    %534 = vmatpush1.msra.mxu0 %v69
    %535 = vmatprep.subr.mxu0 0.0
    %536 = vmatpush1.msra.mxu0 %v68
    %537 = vmatprep.subr.mxu0 0.0
    %538 = vmatpush2.msra.mxu0 %v99
    %539 = vmatprep.subr.mxu0 0.0
    %540 = vmatpush2.msra.mxu0 %v98
    %541 = vmatprep.subr.mxu0 0.0
    %542 = vmatpush2.msra.mxu0 %v97
    %543 = vmatprep.subr.mxu0 0.0
    %544 = vmatpush2.msra.mxu0 %v96
    %545 = vmatprep.subr.mxu0 0.0
    %546 = vmatpush2.msra.mxu0 %v95
    %547 = vmatprep.subr.mxu0 0.0
    %548 = vmatpush2.msra.mxu0 %v94
    %549 = vmatprep.subr.mxu0 0.0
    %550 = vmatpush2.msra.mxu0 %v93
    %551 = vmatprep.subr.mxu0 0.0
    %552 = vmatpush2.msra.mxu0 %v92
    %553 = vmatprep.subr.mxu0 0.0
    %554 = vmatpush2.msra.mxu0 %v91
    %555 = vmatprep.subr.mxu0 0.0
    %556 = vmatpush2.msra.mxu0 %v90
    %557 = vmatprep.subr.mxu0 0.0
    %558 = vmatpush2.msra.mxu0 %v89
    %559 = vmatprep.subr.mxu0 0.0
    %560 = vmatpush2.msra.mxu0 %v88
    %561 = vmatprep.subr.mxu0 0.0
    %562 = vmatpush2.msra.mxu0 %v87
    %563 = vmatprep.subr.mxu0 0.0
    %564 = vmatpush2.msra.mxu0 %v86
    %565 = vmatprep.subr.mxu0 0.0
    %566 = vmatpush2.msra.mxu0 %v85
    %567 = vmatprep.subr.mxu0 0.0
    %568 = vmatpush2.msra.mxu0 %v84
    %569 = vmatprep.mubr.f32.mxu0 %v502
    %570 = vmatmul.mubr.f32.gmra.mxu0 %v501
    %v571 = vpop.f32.mrf.mxu0
    %v572 = vadd.f32 %v105, %v571
    %v573 = vpop.f32.mrf.mxu0
    %574 = vdwg.mxu0
    %v575 = vtanh.pop %v572
    %576 = vmatprep.subr.mxu0 0.0
    %577 = vmatpush1.msra.mxu0 %v67
    %578 = vmatprep.subr.mxu0 0.0
    %579 = vmatpush1.msra.mxu0 %v66
    %580 = vmatprep.subr.mxu0 0.0
    %581 = vmatpush1.msra.mxu0 %v65
    %582 = vmatprep.subr.mxu0 0.0
    %583 = vmatpush1.msra.mxu0 %v64
    %584 = vmatprep.subr.mxu0 0.0
    %585 = vmatpush1.msra.mxu0 %v63
    %586 = vmatprep.subr.mxu0 0.0
    %587 = vmatpush1.msra.mxu0 %v62
    %588 = vmatprep.subr.mxu0 0.0
    %589 = vmatpush1.msra.mxu0 %v61
    %590 = vmatprep.subr.mxu0 0.0
    %591 = vmatpush1.msra.mxu0 %v60
    %592 = vmatprep.subr.mxu0 0.0
    %593 = vmatpush1.msra.mxu0 %v59
    %594 = vmatprep.subr.mxu0 0.0
    %595 = vmatpush1.msra.mxu0 %v58
    %596 = vmatprep.subr.mxu0 0.0
    %597 = vmatpush1.msra.mxu0 %v57
    %598 = vmatprep.subr.mxu0 0.0
    %599 = vmatpush1.msra.mxu0 %v56
    %600 = vmatprep.subr.mxu0 0.0
    %601 = vmatpush1.msra.mxu0 %v55
    %602 = vmatprep.subr.mxu0 0.0
    %603 = vmatpush1.msra.mxu0 %v54
    %604 = vmatprep.subr.mxu0 0.0
    %605 = vmatpush1.msra.mxu0 %v53
    %606 = vmatprep.subr.mxu0 0.0
    %607 = vmatpush1.msra.mxu0 %v52
    %608 = vmatprep.subr.mxu0 0.0
    %609 = vmatpush2.msra.mxu0 0.0
    %610 = vmatprep.subr.mxu0 0.0
    %611 = vmatpush2.msra.mxu0 0.0
    %612 = vmatprep.subr.mxu0 0.0
    %613 = vmatpush2.msra.mxu0 0.0
    %614 = vmatprep.subr.mxu0 0.0
    %615 = vmatpush2.msra.mxu0 0.0
    %616 = vmatprep.subr.mxu0 0.0
    %617 = vmatpush2.msra.mxu0 0.0
    %618 = vmatprep.subr.mxu0 0.0
    %619 = vmatpush2.msra.mxu0 0.0
    %620 = vmatprep.subr.mxu0 0.0
    %621 = vmatpush2.msra.mxu0 0.0
    %622 = vmatprep.subr.mxu0 0.0
    %623 = vmatpush2.msra.mxu0 0.0
    %624 = vmatprep.subr.mxu0 0.0
    %625 = vmatpush2.msra.mxu0 0.0
    %626 = vmatprep.subr.mxu0 0.0
    %627 = vmatpush2.msra.mxu0 0.0
    %628 = vmatprep.subr.mxu0 0.0
    %629 = vmatpush2.msra.mxu0 0.0
    %630 = vmatprep.subr.mxu0 0.0
    %631 = vmatpush2.msra.mxu0 0.0
    %632 = vmatprep.subr.mxu0 0.0
    %633 = vmatpush2.msra.mxu0 0.0
    %634 = vmatprep.subr.mxu0 0.0
    %635 = vmatpush2.msra.mxu0 0.0
    %636 = vmatprep.subr.mxu0 0.0
    %637 = vmatpush2.msra.mxu0 0.0
    %638 = vmatprep.subr.mxu0 0.0
    %639 = vmatpush2.msra.mxu0 0.0
    %640 = vmatprep.mubr.f32.mxu0 0.0
    %641 = vmatmul.mubr.f32.gmra.mxu0 %v501
    %v642 = vpop.f32.mrf.mxu0
    %v643 = vadd.f32 0.0, %v642
    %v644 = vpop.f32.mrf.mxu0
    %645 = vdwg.mxu0
    %v647 = vrot.slane %v643, 2
    %v649 = vadd.f32 %v190, %v647
    %v650 = vtanh.pop %v649
    %v652 = vrot.slane %v575, 2
    %v654 = vrot.slane %v650, 6
    %v655 = vrot.slane %v652, 6
    %658 = vmatprep.subr.mxu0 0.0
    %659 = vmatpush1.msra.mxu0 %v83
    %660 = vmatprep.subr.mxu0 0.0
    %661 = vmatpush1.msra.mxu0 %v82
    %662 = vmatprep.subr.mxu0 0.0
    %663 = vmatpush1.msra.mxu0 %v81
    %664 = vmatprep.subr.mxu0 0.0
    %665 = vmatpush1.msra.mxu0 %v80
    %666 = vmatprep.subr.mxu0 0.0
    %667 = vmatpush1.msra.mxu0 %v79
    %668 = vmatprep.subr.mxu0 0.0
    %669 = vmatpush1.msra.mxu0 %v78
    %670 = vmatprep.subr.mxu0 0.0
    %671 = vmatpush1.msra.mxu0 %v77
    %672 = vmatprep.subr.mxu0 0.0
    %673 = vmatpush1.msra.mxu0 %v76
    %674 = vmatprep.subr.mxu0 0.0
    %675 = vmatpush1.msra.mxu0 %v75
    %676 = vmatprep.subr.mxu0 0.0
    %677 = vmatpush1.msra.mxu0 %v74
    %678 = vmatprep.subr.mxu0 0.0
    %679 = vmatpush1.msra.mxu0 %v73
    %680 = vmatprep.subr.mxu0 0.0
    %681 = vmatpush1.msra.mxu0 %v72
    %682 = vmatprep.subr.mxu0 0.0
    %683 = vmatpush1.msra.mxu0 %v71
    %684 = vmatprep.subr.mxu0 0.0
    %685 = vmatpush1.msra.mxu0 %v70
    %686 = vmatprep.subr.mxu0 0.0
    %687 = vmatpush1.msra.mxu0 %v69
    %688 = vmatprep.subr.mxu0 0.0
    %689 = vmatpush1.msra.mxu0 %v68
    %690 = vmatprep.subr.mxu0 0.0
    %691 = vmatpush2.msra.mxu0 %v99
    %692 = vmatprep.subr.mxu0 0.0
    %693 = vmatpush2.msra.mxu0 %v98
    %694 = vmatprep.subr.mxu0 0.0
    %695 = vmatpush2.msra.mxu0 %v97
    %696 = vmatprep.subr.mxu0 0.0
    %697 = vmatpush2.msra.mxu0 %v96
    %698 = vmatprep.subr.mxu0 0.0
    %699 = vmatpush2.msra.mxu0 %v95
    %700 = vmatprep.subr.mxu0 0.0
    %701 = vmatpush2.msra.mxu0 %v94
    %702 = vmatprep.subr.mxu0 0.0
    %703 = vmatpush2.msra.mxu0 %v93
    %704 = vmatprep.subr.mxu0 0.0
    %705 = vmatpush2.msra.mxu0 %v92
    %706 = vmatprep.subr.mxu0 0.0
    %707 = vmatpush2.msra.mxu0 %v91
    %708 = vmatprep.subr.mxu0 0.0
    %709 = vmatpush2.msra.mxu0 %v90
    %710 = vmatprep.subr.mxu0 0.0
    %711 = vmatpush2.msra.mxu0 %v89
    %712 = vmatprep.subr.mxu0 0.0
    %713 = vmatpush2.msra.mxu0 %v88
    %714 = vmatprep.subr.mxu0 0.0
    %715 = vmatpush2.msra.mxu0 %v87
    %716 = vmatprep.subr.mxu0 0.0
    %717 = vmatpush2.msra.mxu0 %v86
    %718 = vmatprep.subr.mxu0 0.0
    %719 = vmatpush2.msra.mxu0 %v85
    %720 = vmatprep.subr.mxu0 0.0
    %721 = vmatpush2.msra.mxu0 %v84
    %722 = vmatprep.mubr.f32.mxu0 %v655
    %723 = vmatmul.mubr.f32.gmra.mxu0 %v654
    %v724 = vpop.f32.mrf.mxu0
    %v725 = vadd.f32 %v105, %v724
    %v726 = vpop.f32.mrf.mxu0
    %727 = vdwg.mxu0
    %v728 = vtanh.pop %v725
    %729 = vmatprep.subr.mxu0 0.0
    %730 = vmatpush1.msra.mxu0 %v67
    %731 = vmatprep.subr.mxu0 0.0
    %732 = vmatpush1.msra.mxu0 %v66
    %733 = vmatprep.subr.mxu0 0.0
    %734 = vmatpush1.msra.mxu0 %v65
    %735 = vmatprep.subr.mxu0 0.0
    %736 = vmatpush1.msra.mxu0 %v64
    %737 = vmatprep.subr.mxu0 0.0
    %738 = vmatpush1.msra.mxu0 %v63
    %739 = vmatprep.subr.mxu0 0.0
    %740 = vmatpush1.msra.mxu0 %v62
    %741 = vmatprep.subr.mxu0 0.0
    %742 = vmatpush1.msra.mxu0 %v61
    %743 = vmatprep.subr.mxu0 0.0
    %744 = vmatpush1.msra.mxu0 %v60
    %745 = vmatprep.subr.mxu0 0.0
    %746 = vmatpush1.msra.mxu0 %v59
    %747 = vmatprep.subr.mxu0 0.0
    %748 = vmatpush1.msra.mxu0 %v58
    %749 = vmatprep.subr.mxu0 0.0
    %750 = vmatpush1.msra.mxu0 %v57
    %751 = vmatprep.subr.mxu0 0.0
    %752 = vmatpush1.msra.mxu0 %v56
    %753 = vmatprep.subr.mxu0 0.0
    %754 = vmatpush1.msra.mxu0 %v55
    %755 = vmatprep.subr.mxu0 0.0
    %756 = vmatpush1.msra.mxu0 %v54
    %757 = vmatprep.subr.mxu0 0.0
    %758 = vmatpush1.msra.mxu0 %v53
    %759 = vmatprep.subr.mxu0 0.0
    %760 = vmatpush1.msra.mxu0 %v52
    %761 = vmatprep.subr.mxu0 0.0
    %762 = vmatpush2.msra.mxu0 0.0
    %763 = vmatprep.subr.mxu0 0.0
    %764 = vmatpush2.msra.mxu0 0.0
    %765 = vmatprep.subr.mxu0 0.0
    %766 = vmatpush2.msra.mxu0 0.0
    %767 = vmatprep.subr.mxu0 0.0
    %768 = vmatpush2.msra.mxu0 0.0
    %769 = vmatprep.subr.mxu0 0.0
    %770 = vmatpush2.msra.mxu0 0.0
    %771 = vmatprep.subr.mxu0 0.0
    %772 = vmatpush2.msra.mxu0 0.0
    %773 = vmatprep.subr.mxu0 0.0
    %774 = vmatpush2.msra.mxu0 0.0
    %775 = vmatprep.subr.mxu0 0.0
    %776 = vmatpush2.msra.mxu0 0.0
    %777 = vmatprep.subr.mxu0 0.0
    %778 = vmatpush2.msra.mxu0 0.0
    %779 = vmatprep.subr.mxu0 0.0
    %780 = vmatpush2.msra.mxu0 0.0
    %781 = vmatprep.subr.mxu0 0.0
    %782 = vmatpush2.msra.mxu0 0.0
    %783 = vmatprep.subr.mxu0 0.0
    %784 = vmatpush2.msra.mxu0 0.0
    %785 = vmatprep.subr.mxu0 0.0
    %786 = vmatpush2.msra.mxu0 0.0
    %787 = vmatprep.subr.mxu0 0.0
    %788 = vmatpush2.msra.mxu0 0.0
    %789 = vmatprep.subr.mxu0 0.0
    %790 = vmatpush2.msra.mxu0 0.0
    %791 = vmatprep.subr.mxu0 0.0
    %792 = vmatpush2.msra.mxu0 0.0
    %793 = vmatprep.mubr.f32.mxu0 0.0
    %794 = vmatmul.mubr.f32.gmra.mxu0 %v654
    %v795 = vpop.f32.mrf.mxu0
    %v796 = vadd.f32 0.0, %v795
    %v797 = vpop.f32.mrf.mxu0
    %798 = vdwg.mxu0
    %v799 = vadd.f32 %v195, %v796
    %v800 = vtanh.pop %v799
    %801 = vmatprep.subr.mxu0 0.0
    %802 = vmatpush1.msra.mxu0 %v83
    %803 = vmatprep.subr.mxu0 0.0
    %804 = vmatpush1.msra.mxu0 %v82
    %805 = vmatprep.subr.mxu0 0.0
    %806 = vmatpush1.msra.mxu0 %v81
    %807 = vmatprep.subr.mxu0 0.0
    %808 = vmatpush1.msra.mxu0 %v80
    %809 = vmatprep.subr.mxu0 0.0
    %810 = vmatpush1.msra.mxu0 %v79
    %811 = vmatprep.subr.mxu0 0.0
    %812 = vmatpush1.msra.mxu0 %v78
    %813 = vmatprep.subr.mxu0 0.0
    %814 = vmatpush1.msra.mxu0 %v77
    %815 = vmatprep.subr.mxu0 0.0
    %816 = vmatpush1.msra.mxu0 %v76
    %817 = vmatprep.subr.mxu0 0.0
    %818 = vmatpush1.msra.mxu0 %v75
    %819 = vmatprep.subr.mxu0 0.0
    %820 = vmatpush1.msra.mxu0 %v74
    %821 = vmatprep.subr.mxu0 0.0
    %822 = vmatpush1.msra.mxu0 %v73
    %823 = vmatprep.subr.mxu0 0.0
    %824 = vmatpush1.msra.mxu0 %v72
    %825 = vmatprep.subr.mxu0 0.0
    %826 = vmatpush1.msra.mxu0 %v71
    %827 = vmatprep.subr.mxu0 0.0
    %828 = vmatpush1.msra.mxu0 %v70
    %829 = vmatprep.subr.mxu0 0.0
    %830 = vmatpush1.msra.mxu0 %v69
    %831 = vmatprep.subr.mxu0 0.0
    %832 = vmatpush1.msra.mxu0 %v68
    %833 = vmatprep.subr.mxu0 0.0
    %834 = vmatpush2.msra.mxu0 %v99
    %835 = vmatprep.subr.mxu0 0.0
    %836 = vmatpush2.msra.mxu0 %v98
    %837 = vmatprep.subr.mxu0 0.0
    %838 = vmatpush2.msra.mxu0 %v97
    %839 = vmatprep.subr.mxu0 0.0
    %840 = vmatpush2.msra.mxu0 %v96
    %841 = vmatprep.subr.mxu0 0.0
    %842 = vmatpush2.msra.mxu0 %v95
    %843 = vmatprep.subr.mxu0 0.0
    %844 = vmatpush2.msra.mxu0 %v94
    %845 = vmatprep.subr.mxu0 0.0
    %846 = vmatpush2.msra.mxu0 %v93
    %847 = vmatprep.subr.mxu0 0.0
    %848 = vmatpush2.msra.mxu0 %v92
    %849 = vmatprep.subr.mxu0 0.0
    %850 = vmatpush2.msra.mxu0 %v91
    %851 = vmatprep.subr.mxu0 0.0
    %852 = vmatpush2.msra.mxu0 %v90
    %853 = vmatprep.subr.mxu0 0.0
    %854 = vmatpush2.msra.mxu0 %v89
    %855 = vmatprep.subr.mxu0 0.0
    %856 = vmatpush2.msra.mxu0 %v88
    %857 = vmatprep.subr.mxu0 0.0
    %858 = vmatpush2.msra.mxu0 %v87
    %859 = vmatprep.subr.mxu0 0.0
    %860 = vmatpush2.msra.mxu0 %v86
    %861 = vmatprep.subr.mxu0 0.0
    %862 = vmatpush2.msra.mxu0 %v85
    %863 = vmatprep.subr.mxu0 0.0
    %864 = vmatpush2.msra.mxu0 %v84
    %865 = vmatprep.mubr.f32.mxu0 %v728
    %866 = vmatmul.mubr.f32.gmra.mxu0 %v800
    %v867 = vpop.f32.mrf.mxu0
    %v868 = vadd.f32 %v105, %v867
    %v869 = vpop.f32.mrf.mxu0
    %870 = vdwg.mxu0
    %v871 = vtanh.pop %v868
    %v872 = vmax.f32 %v269, 0.0
    %v873 = vmax.f32 %v422, 0.0
    %v874 = vmax.f32 %v575, 0.0
    %v875 = vmax.f32 %v728, 0.0
    %v876 = vmax.f32 %v871, 0.0
    %s877 = smul.u32 8, 80
    %s878 = smul.u32 %s877, 2
    %s879 = sshll.u32 %s878, 4
    %880 = dma.done [#allocation3], %s879
    %v881 = vld [vmem:[#allocation2] sm:$0xff]
    %v882 = vld [vmem:[#allocation2 + $0x8] sm:$0xff]
    %v883 = vld [vmem:[#allocation2 + $0x10] sm:$0xff]
    %v884 = vld [vmem:[#allocation2 + $0x18] sm:$0xff]
    %v885 = vld [vmem:[#allocation2 + $0x20] sm:$0xff]
    %v886 = vld [vmem:[#allocation2 + $0x28] sm:$0xff]
    %v887 = vld [vmem:[#allocation2 + $0x30] sm:$0xff]
    %v888 = vld [vmem:[#allocation2 + $0x38] sm:$0xff]
    %v889 = vld [vmem:[#allocation2 + $0x40] sm:$0xff]
    %v890 = vld [vmem:[#allocation2 + $0x48] sm:$0xff]
    %v891 = vld [vmem:[#allocation2 + $0x50] sm:$0xff]
    %v892 = vld [vmem:[#allocation2 + $0x58] sm:$0xff]
    %v893 = vld [vmem:[#allocation2 + $0x60] sm:$0xff]
    %v894 = vld [vmem:[#allocation2 + $0x68] sm:$0xff]
    %v895 = vld [vmem:[#allocation2 + $0x70] sm:$0xff]
    %v896 = vld [vmem:[#allocation2 + $0x78] sm:$0xff]
    %v897 = vld [vmem:[#allocation2 + $0x80] sm:$0xff]
    %v898 = vld [vmem:[#allocation2 + $0x88] sm:$0xff]
    %v899 = vld [vmem:[#allocation2 + $0x90] sm:$0xff]
    %v900 = vld [vmem:[#allocation2 + $0x98] sm:$0xff]
    %v901 = vld [vmem:[#allocation2 + $0xa0] sm:$0xff]
    %v902 = vld [vmem:[#allocation2 + $0xa8] sm:$0xff]
    %v903 = vld [vmem:[#allocation2 + $0xb0] sm:$0xff]
    %v904 = vld [vmem:[#allocation2 + $0xb8] sm:$0xff]
    %v905 = vld [vmem:[#allocation2 + $0xc0] sm:$0xff]
    %v906 = vld [vmem:[#allocation2 + $0xc8] sm:$0xff]
    %v907 = vld [vmem:[#allocation2 + $0xd0] sm:$0xff]
    %v908 = vld [vmem:[#allocation2 + $0xd8] sm:$0xff]
    %v909 = vld [vmem:[#allocation2 + $0xe0] sm:$0xff]
    %v910 = vld [vmem:[#allocation2 + $0xe8] sm:$0xff]
    %v911 = vld [vmem:[#allocation2 + $0xf0] sm:$0xff]
    %v912 = vld [vmem:[#allocation2 + $0xf8] sm:$0xff]
    %v913 = vld [vmem:[#allocation2 + $0x100] sm:$0xff]
    %v914 = vld [vmem:[#allocation2 + $0x108] sm:$0xff]
    %v915 = vld [vmem:[#allocation2 + $0x110] sm:$0xff]
    %v916 = vld [vmem:[#allocation2 + $0x118] sm:$0xff]
    %v917 = vld [vmem:[#allocation2 + $0x120] sm:$0xff]
    %v918 = vld [vmem:[#allocation2 + $0x128] sm:$0xff]
    %v919 = vld [vmem:[#allocation2 + $0x130] sm:$0xff]
    %v920 = vld [vmem:[#allocation2 + $0x138] sm:$0xff]
    %v921 = vld [vmem:[#allocation2 + $0x140] sm:$0xff]
    %v922 = vld [vmem:[#allocation2 + $0x148] sm:$0xff]
    %v923 = vld [vmem:[#allocation2 + $0x150] sm:$0xff]
    %v924 = vld [vmem:[#allocation2 + $0x158] sm:$0xff]
    %v925 = vld [vmem:[#allocation2 + $0x160] sm:$0xff]
    %v926 = vld [vmem:[#allocation2 + $0x168] sm:$0xff]
    %v927 = vld [vmem:[#allocation2 + $0x170] sm:$0xff]
    %v928 = vld [vmem:[#allocation2 + $0x178] sm:$0xff]
    %v929 = vld [vmem:[#allocation2 + $0x180] sm:$0xff]
    %v930 = vld [vmem:[#allocation2 + $0x188] sm:$0xff]
    %v931 = vld [vmem:[#allocation2 + $0x190] sm:$0xff]
    %v932 = vld [vmem:[#allocation2 + $0x198] sm:$0xff]
    %v933 = vld [vmem:[#allocation2 + $0x1a0] sm:$0xff]
    %v934 = vld [vmem:[#allocation2 + $0x1a8] sm:$0xff]
    %v935 = vld [vmem:[#allocation2 + $0x1b0] sm:$0xff]
    %v936 = vld [vmem:[#allocation2 + $0x1b8] sm:$0xff]
    %v937 = vld [vmem:[#allocation2 + $0x1c0] sm:$0xff]
    %v938 = vld [vmem:[#allocation2 + $0x1c8] sm:$0xff]
    %v939 = vld [vmem:[#allocation2 + $0x1d0] sm:$0xff]
    %v940 = vld [vmem:[#allocation2 + $0x1d8] sm:$0xff]
    %v941 = vld [vmem:[#allocation2 + $0x1e0] sm:$0xff]
    %v942 = vld [vmem:[#allocation2 + $0x1e8] sm:$0xff]
    %v943 = vld [vmem:[#allocation2 + $0x1f0] sm:$0xff]
    %v944 = vld [vmem:[#allocation2 + $0x1f8] sm:$0xff]
    %v945 = vld [vmem:[#allocation2 + $0x200] sm:$0xff]
    %v946 = vld [vmem:[#allocation2 + $0x208] sm:$0xff]
    %v947 = vld [vmem:[#allocation2 + $0x210] sm:$0xff]
    %v948 = vld [vmem:[#allocation2 + $0x218] sm:$0xff]
    %v949 = vld [vmem:[#allocation2 + $0x220] sm:$0xff]
    %v950 = vld [vmem:[#allocation2 + $0x228] sm:$0xff]
    %v951 = vld [vmem:[#allocation2 + $0x230] sm:$0xff]
    %v952 = vld [vmem:[#allocation2 + $0x238] sm:$0xff]
    %v953 = vld [vmem:[#allocation2 + $0x240] sm:$0xff]
    %v954 = vld [vmem:[#allocation2 + $0x248] sm:$0xff]
    %v955 = vld [vmem:[#allocation2 + $0x250] sm:$0xff]
    %v956 = vld [vmem:[#allocation2 + $0x258] sm:$0xff]
    %v957 = vld [vmem:[#allocation2 + $0x260] sm:$0xff]
    %v958 = vld [vmem:[#allocation2 + $0x268] sm:$0xff]
    %v959 = vld [vmem:[#allocation2 + $0x270] sm:$0xff]
    %v960 = vld [vmem:[#allocation2 + $0x278] sm:$0xff]
    %v961 = vld [vmem:[#allocation2 + $0x280] sm:$0xff]
    %v962 = vld [vmem:[#allocation2 + $0x288] sm:$0xff]
    %v963 = vld [vmem:[#allocation2 + $0x290] sm:$0xff]
    %v964 = vld [vmem:[#allocation2 + $0x298] sm:$0xff]
    %v965 = vld [vmem:[#allocation2 + $0x2a0] sm:$0xff]
    %v966 = vld [vmem:[#allocation2 + $0x2a8] sm:$0xff]
    %v967 = vld [vmem:[#allocation2 + $0x2b0] sm:$0xff]
    %v968 = vld [vmem:[#allocation2 + $0x2b8] sm:$0xff]
    %v969 = vld [vmem:[#allocation2 + $0x2c0] sm:$0xff]
    %v970 = vld [vmem:[#allocation2 + $0x2c8] sm:$0xff]
    %v971 = vld [vmem:[#allocation2 + $0x2d0] sm:$0xff]
    %v972 = vld [vmem:[#allocation2 + $0x2d8] sm:$0xff]
    %v973 = vld [vmem:[#allocation2 + $0x2e0] sm:$0xff]
    %v974 = vld [vmem:[#allocation2 + $0x2e8] sm:$0xff]
    %v975 = vld [vmem:[#allocation2 + $0x2f0] sm:$0xff]
    %v976 = vld [vmem:[#allocation2 + $0x2f8] sm:$0xff]
    %v977 = vld [vmem:[#allocation2 + $0x300] sm:$0xff]
    %v978 = vld [vmem:[#allocation2 + $0x308] sm:$0xff]
    %v979 = vld [vmem:[#allocation2 + $0x310] sm:$0xff]
    %v980 = vld [vmem:[#allocation2 + $0x318] sm:$0xff]
    %v981 = vld [vmem:[#allocation2 + $0x320] sm:$0xff]
    %v982 = vld [vmem:[#allocation2 + $0x328] sm:$0xff]
    %v983 = vld [vmem:[#allocation2 + $0x330] sm:$0xff]
    %v984 = vld [vmem:[#allocation2 + $0x338] sm:$0xff]
    %v985 = vld [vmem:[#allocation2 + $0x340] sm:$0xff]
    %v986 = vld [vmem:[#allocation2 + $0x348] sm:$0xff]
    %v987 = vld [vmem:[#allocation2 + $0x350] sm:$0xff]
    %v988 = vld [vmem:[#allocation2 + $0x358] sm:$0xff]
    %v989 = vld [vmem:[#allocation2 + $0x360] sm:$0xff]
    %v990 = vld [vmem:[#allocation2 + $0x368] sm:$0xff]
    %v991 = vld [vmem:[#allocation2 + $0x370] sm:$0xff]
    %v992 = vld [vmem:[#allocation2 + $0x378] sm:$0xff]
    %v993 = vld [vmem:[#allocation2 + $0x380] sm:$0xff]
    %v994 = vld [vmem:[#allocation2 + $0x388] sm:$0xff]
    %v995 = vld [vmem:[#allocation2 + $0x390] sm:$0xff]
    %v996 = vld [vmem:[#allocation2 + $0x398] sm:$0xff]
    %v997 = vld [vmem:[#allocation2 + $0x3a0] sm:$0xff]
    %v998 = vld [vmem:[#allocation2 + $0x3a8] sm:$0xff]
    %v999 = vld [vmem:[#allocation2 + $0x3b0] sm:$0xff]
    %v1000 = vld [vmem:[#allocation2 + $0x3b8] sm:$0xff]
    %v1001 = vld [vmem:[#allocation2 + $0x3c0] sm:$0xff]
    %v1002 = vld [vmem:[#allocation2 + $0x3c8] sm:$0xff]
    %v1003 = vld [vmem:[#allocation2 + $0x3d0] sm:$0xff]
    %v1004 = vld [vmem:[#allocation2 + $0x3d8] sm:$0xff]
    %v1005 = vld [vmem:[#allocation2 + $0x3e0] sm:$0xff]
    %v1006 = vld [vmem:[#allocation2 + $0x3e8] sm:$0xff]
    %v1007 = vld [vmem:[#allocation2 + $0x3f0] sm:$0xff]
    %v1008 = vld [vmem:[#allocation2 + $0x3f8] sm:$0xff]
    %v1009 = vld [vmem:[#allocation2 + $0x400] sm:$0xff]
    %v1010 = vld [vmem:[#allocation2 + $0x408] sm:$0xff]
    %v1011 = vld [vmem:[#allocation2 + $0x410] sm:$0xff]
    %v1012 = vld [vmem:[#allocation2 + $0x418] sm:$0xff]
    %v1013 = vld [vmem:[#allocation2 + $0x420] sm:$0xff]
    %v1014 = vld [vmem:[#allocation2 + $0x428] sm:$0xff]
    %v1015 = vld [vmem:[#allocation2 + $0x430] sm:$0xff]
    %v1016 = vld [vmem:[#allocation2 + $0x438] sm:$0xff]
    %v1017 = vld [vmem:[#allocation2 + $0x440] sm:$0xff]
    %v1018 = vld [vmem:[#allocation2 + $0x448] sm:$0xff]
    %v1019 = vld [vmem:[#allocation2 + $0x450] sm:$0xff]
    %v1020 = vld [vmem:[#allocation2 + $0x458] sm:$0xff]
    %v1021 = vld [vmem:[#allocation2 + $0x460] sm:$0xff]
    %v1022 = vld [vmem:[#allocation2 + $0x468] sm:$0xff]
    %v1023 = vld [vmem:[#allocation2 + $0x470] sm:$0xff]
    %v1024 = vld [vmem:[#allocation2 + $0x478] sm:$0xff]
    %v1025 = vld [vmem:[#allocation2 + $0x480] sm:$0xff]
    %v1026 = vld [vmem:[#allocation2 + $0x488] sm:$0xff]
    %v1027 = vld [vmem:[#allocation2 + $0x490] sm:$0xff]
    %v1028 = vld [vmem:[#allocation2 + $0x498] sm:$0xff]
    %v1029 = vld [vmem:[#allocation2 + $0x4a0] sm:$0xff]
    %v1030 = vld [vmem:[#allocation2 + $0x4a8] sm:$0xff]
    %v1031 = vld [vmem:[#allocation2 + $0x4b0] sm:$0xff]
    %v1032 = vld [vmem:[#allocation2 + $0x4b8] sm:$0xff]
    %v1033 = vld [vmem:[#allocation2 + $0x4c0] sm:$0xff]
    %v1034 = vld [vmem:[#allocation2 + $0x4c8] sm:$0xff]
    %v1035 = vld [vmem:[#allocation2 + $0x4d0] sm:$0xff]
    %v1036 = vld [vmem:[#allocation2 + $0x4d8] sm:$0xff]
    %v1037 = vld [vmem:[#allocation2 + $0x4e0] sm:$0xff]
    %v1038 = vld [vmem:[#allocation2 + $0x4e8] sm:$0xff]
    %v1039 = vld [vmem:[#allocation2 + $0x4f0] sm:$0xff]
    %v1040 = vld [vmem:[#allocation2 + $0x4f8] sm:$0xff]
    %v1041 = vld [vmem:[%s7] sm:$0x3]
    %v1043 = vlaneseq
    %v1044 = vshrl.u32 %v1043, 7
    %v1045 = vsub.s32 0, %v1044
    %v1046 = vrot.slane %v1041, %v1045
    %v1047 = vlaneseq
    %v1048 = vshrl.u32 %v1047, 7
    %v1049 = vsub.s32 1, %v1048
    %v1050 = vrot.slane %v1041, %v1049
    %1053 = vmatprep.subr.mxu0 %v912
    %1054 = vmatpush1.msra.mxu0 %v911
    %1055 = vmatprep.subr.mxu0 %v910
    %1056 = vmatpush1.msra.mxu0 %v909
    %1057 = vmatprep.subr.mxu0 %v908
    %1058 = vmatpush1.msra.mxu0 %v907
    %1059 = vmatprep.subr.mxu0 %v906
    %1060 = vmatpush1.msra.mxu0 %v905
    %1061 = vmatprep.subr.mxu0 %v904
    %1062 = vmatpush1.msra.mxu0 %v903
    %1063 = vmatprep.subr.mxu0 %v902
    %1064 = vmatpush1.msra.mxu0 %v901
    %1065 = vmatprep.subr.mxu0 %v900
    %1066 = vmatpush1.msra.mxu0 %v899
    %1067 = vmatprep.subr.mxu0 %v898
    %1068 = vmatpush1.msra.mxu0 %v897
    %1069 = vmatprep.subr.mxu0 %v896
    %1070 = vmatpush1.msra.mxu0 %v895
    %1071 = vmatprep.subr.mxu0 %v894
    %1072 = vmatpush1.msra.mxu0 %v893
    %1073 = vmatprep.subr.mxu0 %v892
    %1074 = vmatpush1.msra.mxu0 %v891
    %1075 = vmatprep.subr.mxu0 %v890
    %1076 = vmatpush1.msra.mxu0 %v889
    %1077 = vmatprep.subr.mxu0 %v888
    %1078 = vmatpush1.msra.mxu0 %v887
    %1079 = vmatprep.subr.mxu0 %v886
    %1080 = vmatpush1.msra.mxu0 %v885
    %1081 = vmatprep.subr.mxu0 %v884
    %1082 = vmatpush1.msra.mxu0 %v883
    %1083 = vmatprep.subr.mxu0 %v882
    %1084 = vmatpush1.msra.mxu0 %v881
    %1085 = vmatprep.subr.mxu0 %v944
    %1086 = vmatpush2.msra.mxu0 %v943
    %1087 = vmatprep.subr.mxu0 %v942
    %1088 = vmatpush2.msra.mxu0 %v941
    %1089 = vmatprep.subr.mxu0 %v940
    %1090 = vmatpush2.msra.mxu0 %v939
    %1091 = vmatprep.subr.mxu0 %v938
    %1092 = vmatpush2.msra.mxu0 %v937
    %1093 = vmatprep.subr.mxu0 %v936
    %1094 = vmatpush2.msra.mxu0 %v935
    %1095 = vmatprep.subr.mxu0 %v934
    %1096 = vmatpush2.msra.mxu0 %v933
    %1097 = vmatprep.subr.mxu0 %v932
    %1098 = vmatpush2.msra.mxu0 %v931
    %1099 = vmatprep.subr.mxu0 %v930
    %1100 = vmatpush2.msra.mxu0 %v929
    %1101 = vmatprep.subr.mxu0 %v928
    %1102 = vmatpush2.msra.mxu0 %v927
    %1103 = vmatprep.subr.mxu0 %v926
    %1104 = vmatpush2.msra.mxu0 %v925
    %1105 = vmatprep.subr.mxu0 %v924
    %1106 = vmatpush2.msra.mxu0 %v923
    %1107 = vmatprep.subr.mxu0 %v922
    %1108 = vmatpush2.msra.mxu0 %v921
    %1109 = vmatprep.subr.mxu0 %v920
    %1110 = vmatpush2.msra.mxu0 %v919
    %1111 = vmatprep.subr.mxu0 %v918
    %1112 = vmatpush2.msra.mxu0 %v917
    %1113 = vmatprep.subr.mxu0 %v916
    %1114 = vmatpush2.msra.mxu0 %v915
    %1115 = vmatprep.subr.mxu0 %v914
    %1116 = vmatpush2.msra.mxu0 %v913
    %1117 = vmatprep.mubr.f32.mxu0 %v873
    %1118 = vmatmul.mubr.f32.gmra.mxu0 %v872
    %v1119 = vpop.f32.mrf.mxu0
    %v1120 = vadd.f32 %v1046, %v1119
    %v1121 = vpop.f32.mrf.mxu0
    %v1122 = vadd.f32 %v1050, %v1121
    %1123 = vdwg.mxu0
    %1124 = vmatprep.subr.mxu0 %v976
    %1125 = vmatpush1.msra.mxu0 %v975
    %1126 = vmatprep.subr.mxu0 %v974
    %1127 = vmatpush1.msra.mxu0 %v973
    %1128 = vmatprep.subr.mxu0 %v972
    %1129 = vmatpush1.msra.mxu0 %v971
    %1130 = vmatprep.subr.mxu0 %v970
    %1131 = vmatpush1.msra.mxu0 %v969
    %1132 = vmatprep.subr.mxu0 %v968
    %1133 = vmatpush1.msra.mxu0 %v967
    %1134 = vmatprep.subr.mxu0 %v966
    %1135 = vmatpush1.msra.mxu0 %v965
    %1136 = vmatprep.subr.mxu0 %v964
    %1137 = vmatpush1.msra.mxu0 %v963
    %1138 = vmatprep.subr.mxu0 %v962
    %1139 = vmatpush1.msra.mxu0 %v961
    %1140 = vmatprep.subr.mxu0 %v960
    %1141 = vmatpush1.msra.mxu0 %v959
    %1142 = vmatprep.subr.mxu0 %v958
    %1143 = vmatpush1.msra.mxu0 %v957
    %1144 = vmatprep.subr.mxu0 %v956
    %1145 = vmatpush1.msra.mxu0 %v955
    %1146 = vmatprep.subr.mxu0 %v954
    %1147 = vmatpush1.msra.mxu0 %v953
    %1148 = vmatprep.subr.mxu0 %v952
    %1149 = vmatpush1.msra.mxu0 %v951
    %1150 = vmatprep.subr.mxu0 %v950
    %1151 = vmatpush1.msra.mxu0 %v949
    %1152 = vmatprep.subr.mxu0 %v948
    %1153 = vmatpush1.msra.mxu0 %v947
    %1154 = vmatprep.subr.mxu0 %v946
    %1155 = vmatpush1.msra.mxu0 %v945
    %1156 = vmatprep.subr.mxu0 %v1008
    %1157 = vmatpush2.msra.mxu0 %v1007
    %1158 = vmatprep.subr.mxu0 %v1006
    %1159 = vmatpush2.msra.mxu0 %v1005
    %1160 = vmatprep.subr.mxu0 %v1004
    %1161 = vmatpush2.msra.mxu0 %v1003
    %1162 = vmatprep.subr.mxu0 %v1002
    %1163 = vmatpush2.msra.mxu0 %v1001
    %1164 = vmatprep.subr.mxu0 %v1000
    %1165 = vmatpush2.msra.mxu0 %v999
    %1166 = vmatprep.subr.mxu0 %v998
    %1167 = vmatpush2.msra.mxu0 %v997
    %1168 = vmatprep.subr.mxu0 %v996
    %1169 = vmatpush2.msra.mxu0 %v995
    %1170 = vmatprep.subr.mxu0 %v994
    %1171 = vmatpush2.msra.mxu0 %v993
    %1172 = vmatprep.subr.mxu0 %v992
    %1173 = vmatpush2.msra.mxu0 %v991
    %1174 = vmatprep.subr.mxu0 %v990
    %1175 = vmatpush2.msra.mxu0 %v989
    %1176 = vmatprep.subr.mxu0 %v988
    %1177 = vmatpush2.msra.mxu0 %v987
    %1178 = vmatprep.subr.mxu0 %v986
    %1179 = vmatpush2.msra.mxu0 %v985
    %1180 = vmatprep.subr.mxu0 %v984
    %1181 = vmatpush2.msra.mxu0 %v983
    %1182 = vmatprep.subr.mxu0 %v982
    %1183 = vmatpush2.msra.mxu0 %v981
    %1184 = vmatprep.subr.mxu0 %v980
    %1185 = vmatpush2.msra.mxu0 %v979
    %1186 = vmatprep.subr.mxu0 %v978
    %1187 = vmatpush2.msra.mxu0 %v977
    %1188 = vmatprep.mubr.f32.mxu0 %v875
    %1189 = vmatmul.mubr.f32.gmra.mxu0 %v874
    %v1190 = vpop.f32.mrf.mxu0
    %v1191 = vadd.f32 %v1120, %v1190
    %v1192 = vpop.f32.mrf.mxu0
    %v1193 = vadd.f32 %v1122, %v1192
    %1194 = vdwg.mxu0
    %1195 = vmatprep.subr.mxu0 %v1040
    %1196 = vmatpush1.msra.mxu0 %v1039
    %1197 = vmatprep.subr.mxu0 %v1038
    %1198 = vmatpush1.msra.mxu0 %v1037
    %1199 = vmatprep.subr.mxu0 %v1036
    %1200 = vmatpush1.msra.mxu0 %v1035
    %1201 = vmatprep.subr.mxu0 %v1034
    %1202 = vmatpush1.msra.mxu0 %v1033
    %1203 = vmatprep.subr.mxu0 %v1032
    %1204 = vmatpush1.msra.mxu0 %v1031
    %1205 = vmatprep.subr.mxu0 %v1030
    %1206 = vmatpush1.msra.mxu0 %v1029
    %1207 = vmatprep.subr.mxu0 %v1028
    %1208 = vmatpush1.msra.mxu0 %v1027
    %1209 = vmatprep.subr.mxu0 %v1026
    %1210 = vmatpush1.msra.mxu0 %v1025
    %1211 = vmatprep.subr.mxu0 %v1024
    %1212 = vmatpush1.msra.mxu0 %v1023
    %1213 = vmatprep.subr.mxu0 %v1022
    %1214 = vmatpush1.msra.mxu0 %v1021
    %1215 = vmatprep.subr.mxu0 %v1020
    %1216 = vmatpush1.msra.mxu0 %v1019
    %1217 = vmatprep.subr.mxu0 %v1018
    %1218 = vmatpush1.msra.mxu0 %v1017
    %1219 = vmatprep.subr.mxu0 %v1016
    %1220 = vmatpush1.msra.mxu0 %v1015
    %1221 = vmatprep.subr.mxu0 %v1014
    %1222 = vmatpush1.msra.mxu0 %v1013
    %1223 = vmatprep.subr.mxu0 %v1012
    %1224 = vmatpush1.msra.mxu0 %v1011
    %1225 = vmatprep.subr.mxu0 %v1010
    %1226 = vmatpush1.msra.mxu0 %v1009
    %1227 = vmatprep.subr.mxu0 0.0
    %1228 = vmatpush2.msra.mxu0 0.0
    %1229 = vmatprep.subr.mxu0 0.0
    %1230 = vmatpush2.msra.mxu0 0.0
    %1231 = vmatprep.subr.mxu0 0.0
    %1232 = vmatpush2.msra.mxu0 0.0
    %1233 = vmatprep.subr.mxu0 0.0
    %1234 = vmatpush2.msra.mxu0 0.0
    %1235 = vmatprep.subr.mxu0 0.0
    %1236 = vmatpush2.msra.mxu0 0.0
    %1237 = vmatprep.subr.mxu0 0.0
    %1238 = vmatpush2.msra.mxu0 0.0
    %1239 = vmatprep.subr.mxu0 0.0
    %1240 = vmatpush2.msra.mxu0 0.0
    %1241 = vmatprep.subr.mxu0 0.0
    %1242 = vmatpush2.msra.mxu0 0.0
    %1243 = vmatprep.subr.mxu0 0.0
    %1244 = vmatpush2.msra.mxu0 0.0
    %1245 = vmatprep.subr.mxu0 0.0
    %1246 = vmatpush2.msra.mxu0 0.0
    %1247 = vmatprep.subr.mxu0 0.0
    %1248 = vmatpush2.msra.mxu0 0.0
    %1249 = vmatprep.subr.mxu0 0.0
    %1250 = vmatpush2.msra.mxu0 0.0
    %1251 = vmatprep.subr.mxu0 0.0
    %1252 = vmatpush2.msra.mxu0 0.0
    %1253 = vmatprep.subr.mxu0 0.0
    %1254 = vmatpush2.msra.mxu0 0.0
    %1255 = vmatprep.subr.mxu0 0.0
    %1256 = vmatpush2.msra.mxu0 0.0
    %1257 = vmatprep.subr.mxu0 0.0
    %1258 = vmatpush2.msra.mxu0 0.0
    %1259 = vmatprep.mubr.f32.mxu0 0.0
    %1260 = vmatmul.mubr.f32.gmra.mxu0 %v876
    %v1261 = vpop.f32.mrf.mxu0
    %v1262 = vadd.f32 %v1191, %v1261
    %v1263 = vpop.f32.mrf.mxu0
    %v1264 = vadd.f32 %v1193, %v1263
    %1265 = vdwg.mxu0
    %v1266 = vmax.f32 %v1262, 0.0
    %v1267 = vmax.f32 %v1264, 0.0
    %v1268 = vld [vmem:[%s8] sm:$0xff]
    %v1269 = vld [vmem:[%s8 + $0x8] sm:$0xff]
    %v1270 = vld [vmem:[%s8 + $0x10] sm:$0xff]
    %v1271 = vld [vmem:[%s8 + $0x18] sm:$0xff]
    %v1272 = vld [vmem:[%s8 + $0x20] sm:$0xff]
    %v1273 = vld [vmem:[%s8 + $0x28] sm:$0xff]
    %v1274 = vld [vmem:[%s8 + $0x30] sm:$0xff]
    %v1275 = vld [vmem:[%s8 + $0x38] sm:$0xff]
    %v1276 = vld [vmem:[%s8 + $0x40] sm:$0xff]
    %v1277 = vld [vmem:[%s8 + $0x48] sm:$0xff]
    %v1278 = vld [vmem:[%s8 + $0x50] sm:$0xff]
    %v1279 = vld [vmem:[%s8 + $0x58] sm:$0xff]
    %v1280 = vld [vmem:[%s8 + $0x60] sm:$0xff]
    %v1281 = vld [vmem:[%s8 + $0x68] sm:$0xff]
    %v1282 = vld [vmem:[%s8 + $0x70] sm:$0xff]
    %v1283 = vld [vmem:[%s8 + $0x78] sm:$0xff]
    %v1284 = vld [vmem:[%s8 + $0x80] sm:$0xff]
    %v1285 = vld [vmem:[%s8 + $0x88] sm:$0xff]
    %v1286 = vld [vmem:[%s8 + $0x90] sm:$0xff]
    %v1287 = vld [vmem:[%s8 + $0x98] sm:$0xff]
    %v1288 = vld [vmem:[%s8 + $0xa0] sm:$0xff]
    %v1289 = vld [vmem:[%s8 + $0xa8] sm:$0xff]
    %v1290 = vld [vmem:[%s8 + $0xb0] sm:$0xff]
    %v1291 = vld [vmem:[%s8 + $0xb8] sm:$0xff]
    %v1292 = vld [vmem:[%s8 + $0xc0] sm:$0xff]
    %v1293 = vld [vmem:[%s8 + $0xc8] sm:$0xff]
    %v1294 = vld [vmem:[%s8 + $0xd0] sm:$0xff]
    %v1295 = vld [vmem:[%s8 + $0xd8] sm:$0xff]
    %v1296 = vld [vmem:[%s8 + $0xe0] sm:$0xff]
    %v1297 = vld [vmem:[%s8 + $0xe8] sm:$0xff]
    %v1298 = vld [vmem:[%s8 + $0xf0] sm:$0xff]
    %v1299 = vld [vmem:[%s8 + $0xf8] sm:$0xff]
    %v1300 = vld [vmem:[%s9] sm:$0x1]
    %v1302 = vlaneseq
    %v1303 = vshrl.u32 %v1302, 7
    %v1304 = vsub.s32 0, %v1303
    %v1305 = vrot.slane %v1300, %v1304
    %1307 = vmatprep.subr.mxu0 0.0
    %1308 = vmatpush1.msra.mxu0 %v1283
    %1309 = vmatprep.subr.mxu0 0.0
    %1310 = vmatpush1.msra.mxu0 %v1282
    %1311 = vmatprep.subr.mxu0 0.0
    %1312 = vmatpush1.msra.mxu0 %v1281
    %1313 = vmatprep.subr.mxu0 0.0
    %1314 = vmatpush1.msra.mxu0 %v1280
    %1315 = vmatprep.subr.mxu0 0.0
    %1316 = vmatpush1.msra.mxu0 %v1279
    %1317 = vmatprep.subr.mxu0 0.0
    %1318 = vmatpush1.msra.mxu0 %v1278
    %1319 = vmatprep.subr.mxu0 0.0
    %1320 = vmatpush1.msra.mxu0 %v1277
    %1321 = vmatprep.subr.mxu0 0.0
    %1322 = vmatpush1.msra.mxu0 %v1276
    %1323 = vmatprep.subr.mxu0 0.0
    %1324 = vmatpush1.msra.mxu0 %v1275
    %1325 = vmatprep.subr.mxu0 0.0
    %1326 = vmatpush1.msra.mxu0 %v1274
    %1327 = vmatprep.subr.mxu0 0.0
    %1328 = vmatpush1.msra.mxu0 %v1273
    %1329 = vmatprep.subr.mxu0 0.0
    %1330 = vmatpush1.msra.mxu0 %v1272
    %1331 = vmatprep.subr.mxu0 0.0
    %1332 = vmatpush1.msra.mxu0 %v1271
    %1333 = vmatprep.subr.mxu0 0.0
    %1334 = vmatpush1.msra.mxu0 %v1270
    %1335 = vmatprep.subr.mxu0 0.0
    %1336 = vmatpush1.msra.mxu0 %v1269
    %1337 = vmatprep.subr.mxu0 0.0
    %1338 = vmatpush1.msra.mxu0 %v1268
    %1339 = vmatprep.subr.mxu0 0.0
    %1340 = vmatpush2.msra.mxu0 %v1299
    %1341 = vmatprep.subr.mxu0 0.0
    %1342 = vmatpush2.msra.mxu0 %v1298
    %1343 = vmatprep.subr.mxu0 0.0
    %1344 = vmatpush2.msra.mxu0 %v1297
    %1345 = vmatprep.subr.mxu0 0.0
    %1346 = vmatpush2.msra.mxu0 %v1296
    %1347 = vmatprep.subr.mxu0 0.0
    %1348 = vmatpush2.msra.mxu0 %v1295
    %1349 = vmatprep.subr.mxu0 0.0
    %1350 = vmatpush2.msra.mxu0 %v1294
    %1351 = vmatprep.subr.mxu0 0.0
    %1352 = vmatpush2.msra.mxu0 %v1293
    %1353 = vmatprep.subr.mxu0 0.0
    %1354 = vmatpush2.msra.mxu0 %v1292
    %1355 = vmatprep.subr.mxu0 0.0
    %1356 = vmatpush2.msra.mxu0 %v1291
    %1357 = vmatprep.subr.mxu0 0.0
    %1358 = vmatpush2.msra.mxu0 %v1290
    %1359 = vmatprep.subr.mxu0 0.0
    %1360 = vmatpush2.msra.mxu0 %v1289
    %1361 = vmatprep.subr.mxu0 0.0
    %1362 = vmatpush2.msra.mxu0 %v1288
    %1363 = vmatprep.subr.mxu0 0.0
    %1364 = vmatpush2.msra.mxu0 %v1287
    %1365 = vmatprep.subr.mxu0 0.0
    %1366 = vmatpush2.msra.mxu0 %v1286
    %1367 = vmatprep.subr.mxu0 0.0
    %1368 = vmatpush2.msra.mxu0 %v1285
    %1369 = vmatprep.subr.mxu0 0.0
    %1370 = vmatpush2.msra.mxu0 %v1284
    %1371 = vmatprep.mubr.f32.mxu0 %v1267
    %1372 = vmatmul.mubr.f32.gmra.mxu0 %v1266
    %v1373 = vpop.f32.mrf.mxu0
    %v1374 = vadd.f32 %v1305, %v1373
    %v1375 = vpop.f32.mrf.mxu0
    %1376 = vdwg.mxu0
    %v1377 = vmax.f32 %v1374, 0.0
    %v1378 = vld [vmem:[%s10] sm:$0xff]
    %v1379 = vld [vmem:[%s10 + $0x8] sm:$0xff]
    %v1380 = vld [vmem:[%s10 + $0x10] sm:$0xff]
    %v1381 = vld [vmem:[%s10 + $0x18] sm:$0xff]
    %v1382 = vld [vmem:[%s10 + $0x20] sm:$0xff]
    %v1383 = vld [vmem:[%s10 + $0x28] sm:$0xff]
    %v1384 = vld [vmem:[%s10 + $0x30] sm:$0xff]
    %v1385 = vld [vmem:[%s10 + $0x38] sm:$0xff]
    %v1386 = vld [vmem:[%s11] sm:$0x1]
    %v1388 = vlaneseq
    %v1389 = vshrl.u32 %v1388, 7
    %v1390 = vsub.s32 0, %v1389
    %v1391 = vrot.slane %v1386, %v1390
    %vm1393 = vcmask 523264
    %v1395 = vsel %vm1393, %v1377, 0
    %1397 = vmatprep.subr.mxu0 0.0
    %1398 = vmatpush1.msra.mxu0 0.0
    %1399 = vmatprep.subr.mxu0 0.0
    %1400 = vmatpush1.msra.mxu0 0.0
    %1401 = vmatprep.subr.mxu0 0.0
    %1402 = vmatpush1.msra.mxu0 0.0
    %1403 = vmatprep.subr.mxu0 0.0
    %1404 = vmatpush1.msra.mxu0 0.0
    %1405 = vmatprep.subr.mxu0 0.0
    %1406 = vmatpush1.msra.mxu0 0.0
    %1407 = vmatprep.subr.mxu0 0.0
    %1408 = vmatpush1.msra.mxu0 0.0
    %1409 = vmatprep.subr.mxu0 0.0
    %1410 = vmatpush1.msra.mxu0 0.0
    %1411 = vmatprep.subr.mxu0 0.0
    %1412 = vmatpush1.msra.mxu0 0.0
    %1413 = vmatprep.subr.mxu0 0.0
    %1414 = vmatpush1.msra.mxu0 %v1385
    %1415 = vmatprep.subr.mxu0 0.0
    %1416 = vmatpush1.msra.mxu0 %v1384
    %1417 = vmatprep.subr.mxu0 0.0
    %1418 = vmatpush1.msra.mxu0 %v1383
    %1419 = vmatprep.subr.mxu0 0.0
    %1420 = vmatpush1.msra.mxu0 %v1382
    %1421 = vmatprep.subr.mxu0 0.0
    %1422 = vmatpush1.msra.mxu0 %v1381
    %1423 = vmatprep.subr.mxu0 0.0
    %1424 = vmatpush1.msra.mxu0 %v1380
    %1425 = vmatprep.subr.mxu0 0.0
    %1426 = vmatpush1.msra.mxu0 %v1379
    %1427 = vmatprep.subr.mxu0 0.0
    %1428 = vmatpush1.msra.mxu0 %v1378
    %1429 = vmatprep.subr.mxu0 0.0
    %1430 = vmatpush2.msra.mxu0 0.0
    %1431 = vmatprep.subr.mxu0 0.0
    %1432 = vmatpush2.msra.mxu0 0.0
    %1433 = vmatprep.subr.mxu0 0.0
    %1434 = vmatpush2.msra.mxu0 0.0
    %1435 = vmatprep.subr.mxu0 0.0
    %1436 = vmatpush2.msra.mxu0 0.0
    %1437 = vmatprep.subr.mxu0 0.0
    %1438 = vmatpush2.msra.mxu0 0.0
    %1439 = vmatprep.subr.mxu0 0.0
    %1440 = vmatpush2.msra.mxu0 0.0
    %1441 = vmatprep.subr.mxu0 0.0
    %1442 = vmatpush2.msra.mxu0 0.0
    %1443 = vmatprep.subr.mxu0 0.0
    %1444 = vmatpush2.msra.mxu0 0.0
    %1445 = vmatprep.subr.mxu0 0.0
    %1446 = vmatpush2.msra.mxu0 0.0
    %1447 = vmatprep.subr.mxu0 0.0
    %1448 = vmatpush2.msra.mxu0 0.0
    %1449 = vmatprep.subr.mxu0 0.0
    %1450 = vmatpush2.msra.mxu0 0.0
    %1451 = vmatprep.subr.mxu0 0.0
    %1452 = vmatpush2.msra.mxu0 0.0
    %1453 = vmatprep.subr.mxu0 0.0
    %1454 = vmatpush2.msra.mxu0 0.0
    %1455 = vmatprep.subr.mxu0 0.0
    %1456 = vmatpush2.msra.mxu0 0.0
    %1457 = vmatprep.subr.mxu0 0.0
    %1458 = vmatpush2.msra.mxu0 0.0
    %1459 = vmatprep.subr.mxu0 0.0
    %1460 = vmatpush2.msra.mxu0 0.0
    %1461 = vmatprep.mubr.f32.mxu0 0.0
    %1462 = vmatmul.mubr.f32.gmra.mxu0 %v1395
    %v1463 = vpop.f32.mrf.mxu0
    %v1464 = vadd.f32 %v1391, %v1463
    %v1465 = vpop.f32.mrf.mxu0
    %1466 = vdwg.mxu0
    %vm1467 = vcmask 25600
    %1468 = vst.msk [vmem:[#allocation4] sm:$0x3] %vm1467, %v1464
    // Predicated region
    $region50: #{tpu_custom_call.1} parent=1 // pred_check
      _
    $region51: #{tpu_custom_call.1} parent=1 // pred_check_branch
      %1470 = sbr.rel (0) target = $region53
    $region52: #{tpu_custom_call.1} parent=1 // pred_region
      %s1472 = ssub.s32 32, 32
      %1473 = vsyncadd [#allocation5], %s1472
      %s1475 = sshll.u32 [#allocation4], 4
      %s1476 = int_to_ptr.vmem [resolvable:$true] %s1475
      %1478 = dma.vmem_to_hbm [thread:$0]  %s1476, 32, %s12, [#allocation5]
    $region53: #{tpu_custom_call.1} parent=1 // pred_fallthru
      _
    // Predicated region
    $region54: #{tpu_custom_call.1} parent=1 // pred_check
      _
    $region55: #{tpu_custom_call.1} parent=1 // pred_check_branch
      %1480 = sbr.rel (0) target = $region57
    $region56: #{tpu_custom_call.1} parent=1 // pred_region
      %1481 = dma.done [#allocation5], 32
    $region57: #{tpu_custom_call.1} parent=1 // pred_fallthru
      _
    %1482 = vsyncpa [#allocation5], 1
  %1483 = vsyncmov [#allocation3]
  %s1484 = vpop.sfrf %1483
  %p1485 = scmp.eq.s32.totalorder %s1484, 0
  %p1486 = pneg %p1485
  %1488 = shalt.err (%p1486)

</llo_original>
